<compile_context>
chip_gen: v6e
topology: v6e:2x2x1
jax: 0.10.0
libtpu: 0.0.40
codegen_flags: <defaults>
</compile_context>

<pallas_src>
import functools
import math

import numpy as np
import jax
import jax.numpy as jnp
from jax.experimental import pallas as pl
from jax.experimental.pallas import tpu as pltpu

LN_EPS = 1e-5
BN_EPS = 1e-5

EMBED_DIMS = [64, 128, 256]
NUM_HEADS = [8, 8, 8]
MLP_RATIOS = [4, 4, 4]
DEPTHS = [6, 6, 6]
SR_RATIOS = [4, 2, 1]

_SQRT1_2 = 0.7071067811865476


# --------------------------------------------------------------------------
# In-kernel elementwise helpers (f32)
# --------------------------------------------------------------------------

def _erf_f32(x):
    # Abramowitz & Stegun 7.1.26 (|err| < 1.5e-7).
    a1, a2, a3, a4, a5 = (0.254829592, -0.284496736, 1.421413741,
                          -1.453152027, 1.061405429)
    p = 0.3275911
    ax = jnp.abs(x)
    t = 1.0 / (1.0 + p * ax)
    poly = ((((a5 * t + a4) * t + a3) * t + a2) * t + a1) * t
    y = 1.0 - poly * jnp.exp(-ax * ax)
    return jnp.where(x >= 0.0, y, -y)


def _apply_act(y, act):
    if act == "gelu":                      # exact-erf GELU (torch nn.GELU)
        return 0.5 * y * (1.0 + _erf_f32(y * _SQRT1_2))
    if act == "leaky":                     # LeakyReLU(0.01)
        return jnp.where(y >= 0.0, y, 0.01 * y)
    return y


def _layernorm_f32(x, g, b):
    mean = jnp.mean(x, axis=-1, keepdims=True)
    xc = x - mean
    var = jnp.mean(xc * xc, axis=-1, keepdims=True)
    return xc * jax.lax.rsqrt(var + LN_EPS) * g + b


# --------------------------------------------------------------------------
# Pallas kernels
# --------------------------------------------------------------------------

def _matmul_affine_kernel(x_ref, w_ref, s_ref, t_ref, o_ref, *, act):
    # o = act((x @ w) * s + t)      (s, t per-output-channel vectors)
    acc = jnp.dot(x_ref[...].astype(jnp.bfloat16), w_ref[...],
                  preferred_element_type=jnp.float32)
    o_ref[...] = _apply_act(acc * s_ref[...] + t_ref[...], act).astype(o_ref.dtype)


def _patch_embed_kernel(x_ref, w1_ref, s1_ref, t1_ref, w2_ref, s2_ref, t2_ref,
                        g_ref, b_ref, pos_ref, o_ref):
    # Whole BasicBlock + LayerNorm + pos-add:
    #   x: (tm, 9*Cin) bf16 im2col tile
    #   conv3x3 (im2col matmul) -> BN -> LeakyReLU -> conv1x1 -> BN -> LeakyReLU
    #   -> LayerNorm(planes) -> + pos
    y = jnp.dot(x_ref[...], w1_ref[...], preferred_element_type=jnp.float32)
    y = _apply_act(y * s1_ref[...] + t1_ref[...], "leaky")
    y = jnp.dot(y.astype(jnp.bfloat16), w2_ref[...],
                preferred_element_type=jnp.float32)
    y = _apply_act(y * s2_ref[...] + t2_ref[...], "leaky")
    y = _layernorm_f32(y, g_ref[...], b_ref[...]) + pos_ref[...]
    o_ref[...] = y.astype(o_ref.dtype)


def _ln_q_h_kernel(x_ref, g_ref, b_ref, wq_ref, q_ref, h_ref):
    # h = LayerNorm(x);  q = h @ Wq (attention scale pre-folded into Wq)
    xn = _layernorm_f32(x_ref[...].astype(jnp.float32), g_ref[...], b_ref[...])
    xnb = xn.astype(jnp.bfloat16)
    q_ref[...] = jnp.dot(xnb, wq_ref[...],
                         preferred_element_type=jnp.float32).astype(q_ref.dtype)
    h_ref[...] = xnb


def _ln_qkv_kernel(x_ref, g_ref, b_ref, w_ref, q_ref, kv_ref, *, c_dim):
    # Single matmul against [Wq*scale | Wkv]; split into q / kv outputs.
    xn = _layernorm_f32(x_ref[...].astype(jnp.float32), g_ref[...], b_ref[...])
    acc = jnp.dot(xn.astype(jnp.bfloat16), w_ref[...],
                  preferred_element_type=jnp.float32)
    q_ref[...] = acc[:, :c_dim].astype(q_ref.dtype)
    kv_ref[...] = acc[:, c_dim:].astype(kv_ref.dtype)


def _sr_kv_kernel(x_ref, wsr_ref, s_ref, t_ref, wkv_ref, o_ref):
    # sr conv (im2col matmul) + conv-bias/BN affine, then kv projection.
    y = jnp.dot(x_ref[...], wsr_ref[...], preferred_element_type=jnp.float32)
    y = y * s_ref[...] + t_ref[...]
    kv = jnp.dot(y.astype(jnp.bfloat16), wkv_ref[...],
                 preferred_element_type=jnp.float32)
    o_ref[...] = kv.astype(o_ref.dtype)


def _attn_kernel(q_ref, kv_ref, wp_ref, pb_ref, res_ref, o_ref, *, num_heads):
    # q_ref: (1, TQ, C) bf16 (scale folded into Wq); kv_ref: (1, Nk, 2C) bf16
    # wp_ref: (C, C) bf16 projection; pb_ref: (1, C) f32 bias
    # res_ref / o_ref: (1, TQ, C) f32 residual stream (residual add fused).
    # Head outputs are accumulated through row-slices of Wproj, so no
    # per-head concat / lane-sparse store is ever materialized.
    q = q_ref[0]
    kv = kv_ref[0]
    C = q.shape[-1]
    d = C // num_heads
    acc = res_ref[0] + pb_ref[...]
    for h in range(num_heads):
        qh = q[:, h * d:(h + 1) * d]
        kh = kv[:, h * d:(h + 1) * d]
        vh = kv[:, C + h * d:C + (h + 1) * d]
        s = jax.lax.dot_general(qh, kh, (((1,), (1,)), ((), ())),
                                preferred_element_type=jnp.float32)   # (TQ, Nk)
        # TODO(synk): on v6e/v7x the exp could run in bf16 for ~2x EUP
        # throughput; kept f32 here for portability (v5e has no bf16 EUP).
        e = jnp.exp(s - jnp.max(s, axis=-1, keepdims=True))
        r = pl.reciprocal(jnp.sum(e, axis=-1, keepdims=True), approx=True)
        pv = jnp.dot(e.astype(jnp.bfloat16), vh,
                     preferred_element_type=jnp.float32) * r          # (TQ, d)
        acc = acc + jnp.dot(pv.astype(jnp.bfloat16),
                            wp_ref[h * d:(h + 1) * d, :],
                            preferred_element_type=jnp.float32)
    o_ref[0] = acc.astype(o_ref.dtype)


def _mlp_kernel(x_ref, g_ref, b_ref, w1_ref, b1_ref, w2_ref, b2_ref, o_ref):
    # LN2 -> fc1 -> GELU -> fc2 -> +bias -> +residual, hidden stays on-chip.
    x = x_ref[...].astype(jnp.float32)
    xn = _layernorm_f32(x, g_ref[...], b_ref[...])
    h = jnp.dot(xn.astype(jnp.bfloat16), w1_ref[...],
                preferred_element_type=jnp.float32) + b1_ref[...]
    h = _apply_act(h, "gelu")
    y = jnp.dot(h.astype(jnp.bfloat16), w2_ref[...],
                preferred_element_type=jnp.float32) + b2_ref[...]
    o_ref[...] = (x + y).astype(o_ref.dtype)


def _ln_kernel(x_ref, g_ref, b_ref, o_ref):
    o_ref[...] = _layernorm_f32(x_ref[...].astype(jnp.float32),
                                g_ref[...], b_ref[...]).astype(o_ref.dtype)


# --------------------------------------------------------------------------
# Tiling helpers
# --------------------------------------------------------------------------

def _pick_tile_m(M):
    for tm in (1024, 512, 256, 128):
        if M % tm == 0 and M >= 2 * tm:
            return tm
    for tm in (512, 256, 128, 64, 32, 16, 8):
        if M % tm == 0:
            return tm
    return M


def _pick_tile_q(N):
    for t in (512, 256, 128):
        if N % t == 0 and N >= 2 * t:
            return t
    return N


# --------------------------------------------------------------------------
# Pallas wrappers
# --------------------------------------------------------------------------

@functools.partial(jax.jit, static_argnames=("act", "out_dtype"))
def pallas_matmul_affine(x, w, scale, shift, *, act=None, out_dtype=jnp.bfloat16):
    M, K = x.shape
    N = w.shape[1]
    tm = _pick_tile_m(M)
    return pl.pallas_call(
        functools.partial(_matmul_affine_kernel, act=act),
        out_shape=jax.ShapeDtypeStruct((M, N), out_dtype),
        grid=(M // tm,),
        in_specs=[pl.BlockSpec((tm, K), lambda i: (i, 0)),
                  pl.BlockSpec((K, N), lambda i: (0, 0)),
                  pl.BlockSpec((1, N), lambda i: (0, 0)),
                  pl.BlockSpec((1, N), lambda i: (0, 0))],
        out_specs=pl.BlockSpec((tm, N), lambda i: (i, 0)),
        compiler_params=pltpu.CompilerParams(dimension_semantics=("parallel",)),
    )(x, w, scale.reshape(1, N), shift.reshape(1, N))


@jax.jit
def pallas_patch_embed(xcol, w1, s1, t1, w2, s2, t2, g, b, pos):
    """BasicBlock (conv3x3+BN+LReLU -> conv1x1+BN+LReLU) + LN + pos, fused."""
    M, K = xcol.shape
    mid = w1.shape[1]
    Cp = w2.shape[1]
    Npos = pos.shape[0]
    tm = _pick_tile_m(M)
    nb = Npos // tm                      # pos repeats every N rows (per batch)
    return pl.pallas_call(
        _patch_embed_kernel,
        out_shape=jax.ShapeDtypeStruct((M, Cp), jnp.float32),
        grid=(M // tm,),
        in_specs=[pl.BlockSpec((tm, K), lambda i: (i, 0)),
                  pl.BlockSpec((K, mid), lambda i: (0, 0)),
                  pl.BlockSpec((1, mid), lambda i: (0, 0)),
                  pl.BlockSpec((1, mid), lambda i: (0, 0)),
                  pl.BlockSpec((mid, Cp), lambda i: (0, 0)),
                  pl.BlockSpec((1, Cp), lambda i: (0, 0)),
                  pl.BlockSpec((1, Cp), lambda i: (0, 0)),
                  pl.BlockSpec((1, Cp), lambda i: (0, 0)),
                  pl.BlockSpec((1, Cp), lambda i: (0, 0)),
                  pl.BlockSpec((tm, Cp), lambda i: (i % nb, 0))],
        out_specs=pl.BlockSpec((tm, Cp), lambda i: (i, 0)),
        compiler_params=pltpu.CompilerParams(dimension_semantics=("parallel",)),
    )(xcol, w1, s1.reshape(1, mid), t1.reshape(1, mid),
      w2, s2.reshape(1, Cp), t2.reshape(1, Cp),
      g.reshape(1, Cp), b.reshape(1, Cp), pos)


@jax.jit
def pallas_ln_q_h(x, g, b, wq):
    M, C = x.shape
    tm = _pick_tile_m(M)
    return pl.pallas_call(
        _ln_q_h_kernel,
        out_shape=[jax.ShapeDtypeStruct((M, C), jnp.bfloat16),
                   jax.ShapeDtypeStruct((M, C), jnp.bfloat16)],
        grid=(M // tm,),
        in_specs=[pl.BlockSpec((tm, C), lambda i: (i, 0)),
                  pl.BlockSpec((1, C), lambda i: (0, 0)),
                  pl.BlockSpec((1, C), lambda i: (0, 0)),
                  pl.BlockSpec((C, C), lambda i: (0, 0))],
        out_specs=[pl.BlockSpec((tm, C), lambda i: (i, 0)),
                   pl.BlockSpec((tm, C), lambda i: (i, 0))],
        compiler_params=pltpu.CompilerParams(dimension_semantics=("parallel",)),
    )(x, g.reshape(1, C), b.reshape(1, C), wq)


@jax.jit
def pallas_ln_qkv(x, g, b, wqkv):
    M, C = x.shape
    tm = _pick_tile_m(M)
    return pl.pallas_call(
        functools.partial(_ln_qkv_kernel, c_dim=C),
        out_shape=[jax.ShapeDtypeStruct((M, C), jnp.bfloat16),
                   jax.ShapeDtypeStruct((M, 2 * C), jnp.bfloat16)],
        grid=(M // tm,),
        in_specs=[pl.BlockSpec((tm, C), lambda i: (i, 0)),
                  pl.BlockSpec((1, C), lambda i: (0, 0)),
                  pl.BlockSpec((1, C), lambda i: (0, 0)),
                  pl.BlockSpec((C, 3 * C), lambda i: (0, 0))],
        out_specs=[pl.BlockSpec((tm, C), lambda i: (i, 0)),
                   pl.BlockSpec((tm, 2 * C), lambda i: (i, 0))],
        compiler_params=pltpu.CompilerParams(dimension_semantics=("parallel",)),
    )(x, g.reshape(1, C), b.reshape(1, C), wqkv)


@jax.jit
def pallas_sr_kv(xcol, wsr, s, t, wkv):
    M, K = xcol.shape
    C = wsr.shape[1]
    N2 = wkv.shape[1]
    tm = _pick_tile_m(M)
    return pl.pallas_call(
        _sr_kv_kernel,
        out_shape=jax.ShapeDtypeStruct((M, N2), jnp.bfloat16),
        grid=(M // tm,),
        in_specs=[pl.BlockSpec((tm, K), lambda i: (i, 0)),
                  pl.BlockSpec((K, C), lambda i: (0, 0)),
                  pl.BlockSpec((1, C), lambda i: (0, 0)),
                  pl.BlockSpec((1, C), lambda i: (0, 0)),
                  pl.BlockSpec((C, N2), lambda i: (0, 0))],
        out_specs=pl.BlockSpec((tm, N2), lambda i: (i, 0)),
        compiler_params=pltpu.CompilerParams(dimension_semantics=("parallel",)),
    )(xcol, wsr, s.reshape(1, C), t.reshape(1, C), wkv)


@functools.partial(jax.jit, static_argnames=("num_heads",))
def pallas_attention(q, kv, wp, pb, res, *, num_heads):
    """Attention + output projection + bias + residual, one kernel."""
    B, N, C = q.shape
    Nk = kv.shape[1]
    TQ = _pick_tile_q(N)
    return pl.pallas_call(
        functools.partial(_attn_kernel, num_heads=num_heads),
        out_shape=jax.ShapeDtypeStruct((B, N, C), jnp.float32),
        grid=(B, N // TQ),
        in_specs=[pl.BlockSpec((1, TQ, C), lambda b, i: (b, i, 0)),
                  pl.BlockSpec((1, Nk, 2 * C), lambda b, i: (b, 0, 0)),
                  pl.BlockSpec((C, C), lambda b, i: (0, 0)),
                  pl.BlockSpec((1, C), lambda b, i: (0, 0)),
                  pl.BlockSpec((1, TQ, C), lambda b, i: (b, i, 0))],
        out_specs=pl.BlockSpec((1, TQ, C), lambda b, i: (b, i, 0)),
        compiler_params=pltpu.CompilerParams(
            dimension_semantics=("parallel", "parallel")),
    )(q, kv, wp, pb.reshape(1, C), res)


@jax.jit
def pallas_mlp(x, g, b, w1, b1, w2, b2):
    M, C = x.shape
    Hd = w1.shape[1]
    tm = _pick_tile_m(M)
    return pl.pallas_call(
        _mlp_kernel,
        out_shape=jax.ShapeDtypeStruct((M, C), jnp.float32),
        grid=(M // tm,),
        in_specs=[pl.BlockSpec((tm, C), lambda i: (i, 0)),
                  pl.BlockSpec((1, C), lambda i: (0, 0)),
                  pl.BlockSpec((1, C), lambda i: (0, 0)),
                  pl.BlockSpec((C, Hd), lambda i: (0, 0)),
                  pl.BlockSpec((1, Hd), lambda i: (0, 0)),
                  pl.BlockSpec((Hd, C), lambda i: (0, 0)),
                  pl.BlockSpec((1, C), lambda i: (0, 0))],
        out_specs=pl.BlockSpec((tm, C), lambda i: (i, 0)),
        compiler_params=pltpu.CompilerParams(dimension_semantics=("parallel",)),
    )(x, g.reshape(1, C), b.reshape(1, C), w1, b1.reshape(1, Hd),
      w2, b2.reshape(1, C))


@jax.jit
def pallas_layernorm(x, g, b):
    M, C = x.shape
    tm = _pick_tile_m(M)
    return pl.pallas_call(
        _ln_kernel,
        out_shape=jax.ShapeDtypeStruct((M, C), jnp.float32),
        grid=(M // tm,),
        in_specs=[pl.BlockSpec((tm, C), lambda i: (i, 0)),
                  pl.BlockSpec((1, C), lambda i: (0, 0)),
                  pl.BlockSpec((1, C), lambda i: (0, 0))],
        out_specs=pl.BlockSpec((tm, C), lambda i: (i, 0)),
        compiler_params=pltpu.CompilerParams(dimension_semantics=("parallel",)),
    )(x, g.reshape(1, C), b.reshape(1, C))


# --------------------------------------------------------------------------
# XLA glue: im2col (ReflectionPad2d(1) + 3x3 windows) and maxpool
# --------------------------------------------------------------------------

def im2col_3x3(x, stride):
    """x (B,H,W,Cin) -> (B,Ho,Wo,9*Cin) with reflect pad 1, tap order (di,dj)."""
    B, H, W, Cin = x.shape
    Ho = (H + 2 - 3) // stride + 1
    Wo = (W + 2 - 3) // stride + 1
    xp = jnp.pad(x, ((0, 0), (1, 1), (1, 1), (0, 0)), mode="reflect")
    cols = [xp[:, di:di + stride * (Ho - 1) + 1:stride,
               dj:dj + stride * (Wo - 1) + 1:stride, :]
            for di in range(3) for dj in range(3)]
    return jnp.concatenate(cols, axis=-1), Ho, Wo


def maxpool_nhwc(x, s):
    B, H, W, C = x.shape
    return x.reshape(B, H // s, s, W // s, s, C).max(axis=(2, 4))


# --------------------------------------------------------------------------
# Parameter initialization (deterministic, shapes match the PyTorch module)
# --------------------------------------------------------------------------

def get_sinusoid_encoding(n_position, d_hid):
    def angle_vec(pos):
        return [pos / np.power(10000, 2 * (j // 2) / d_hid) for j in range(d_hid)]
    table = np.array([angle_vec(p) for p in range(n_position)])
    table[:, 0::2] = np.sin(table[:, 0::2])
    table[:, 1::2] = np.cos(table[:, 1::2])
    return jnp.asarray(table[None], dtype=jnp.float32)


class KeyGen:
    def __init__(self, key):
        self._key = key

    def __call__(self):
        self._key, sub = jax.random.split(self._key)
        return sub


def trunc_normal(key, shape, std=0.02):
    return std * jax.random.truncated_normal(key, -2.0, 2.0, shape, dtype=jnp.float32)


def conv_init(key, shape):
    cout, _, kh, kw = shape
    fan_out = kh * kw * cout
    return jax.random.normal(key, shape, dtype=jnp.float32) * math.sqrt(2.0 / fan_out)


def bn_init(c):
    return {"w": jnp.ones((c,), jnp.float32), "b": jnp.zeros((c,), jnp.float32),
            "rm": jnp.zeros((c,), jnp.float32), "rv": jnp.ones((c,), jnp.float32)}


def pack_conv3x3(w, bn=None, conv_bias=None):
    """torch (Cout,Cin,3,3) -> im2col weight (9*Cin, Cout) bf16 + affine fold."""
    # TODO(synk): BatchNorm is folded in eval mode (running stats at init);
    # train-mode per-batch statistics are not reproduced.
    cout, cin = w.shape[0], w.shape[1]
    wcol = w.transpose(2, 3, 1, 0).reshape(9 * cin, cout).astype(jnp.bfloat16)
    if bn is not None:
        s = bn["w"] / jnp.sqrt(bn["rv"] + BN_EPS)
        t = bn["b"] - bn["rm"] * s
    else:
        s = jnp.ones((cout,), jnp.float32)
        t = jnp.zeros((cout,), jnp.float32)
    if conv_bias is not None:
        t = t + s * conv_bias
    return {"w": wcol, "s": s, "t": t}


def init_basic_block(kg, inplanes, planes):
    mid = inplanes // 2
    c1 = pack_conv3x3(conv_init(kg(), (mid, inplanes, 3, 3)), bn=bn_init(mid))
    w2 = conv_init(kg(), (planes, mid, 1, 1))
    bn2 = bn_init(planes)
    s2 = bn2["w"] / jnp.sqrt(bn2["rv"] + BN_EPS)
    t2 = bn2["b"] - bn2["rm"] * s2
    return {"w1": c1["w"], "s1": c1["s"], "t1": c1["t"],
            "w2": w2.reshape(planes, mid).T.astype(jnp.bfloat16),
            "s2": s2, "t2": t2}


def init_block_params(kg, dim, num_heads, mlp_ratio, sr_ratio):
    hidden = int(dim * mlp_ratio)
    scale = (dim // num_heads) ** (-0.5)
    wq = trunc_normal(kg(), (dim, dim)) * scale          # attn scale folded in
    wkv = trunc_normal(kg(), (dim, 2 * dim))
    p = {
        "ln1_w": jnp.ones((dim,), jnp.float32),
        "ln1_b": jnp.zeros((dim,), jnp.float32),
        "proj_w": trunc_normal(kg(), (dim, dim)).astype(jnp.bfloat16),
        "proj_b": jnp.zeros((dim,), jnp.float32),
        "ln2_w": jnp.ones((dim,), jnp.float32),
        "ln2_b": jnp.zeros((dim,), jnp.float32),
        "fc1_w": trunc_normal(kg(), (dim, hidden)).astype(jnp.bfloat16),
        "fc1_b": jnp.zeros((hidden,), jnp.float32),
        "fc2_w": trunc_normal(kg(), (hidden, dim)).astype(jnp.bfloat16),
        "fc2_b": jnp.zeros((dim,), jnp.float32),
    }
    if sr_ratio > 1:
        p["q_w"] = wq.astype(jnp.bfloat16)
        p["kv_w"] = wkv.astype(jnp.bfloat16)
        sr = pack_conv3x3(conv_init(kg(), (dim, dim, 3, 3)), bn=bn_init(dim),
                          conv_bias=jnp.zeros((dim,), jnp.float32))
        p["sr_w"], p["sr_s"], p["sr_t"] = sr["w"], sr["s"], sr["t"]
    else:
        p["qkv_w"] = jnp.concatenate([wq, wkv], axis=1).astype(jnp.bfloat16)
    return p


def init_ct_params(key, in_chans):
    kg = KeyGen(key)
    conv0 = pack_conv3x3(conv_init(kg(), (32, in_chans, 3, 3)))
    patch_embed = [
        {"conv0_w": conv0["w"], "conv0_s": conv0["s"], "conv0_t": conv0["t"],
         "db": init_basic_block(kg, 32, EMBED_DIMS[0]),
         "norm_w": jnp.ones((EMBED_DIMS[0],), jnp.float32),
         "norm_b": jnp.zeros((EMBED_DIMS[0],), jnp.float32)},
        {"db": init_basic_block(kg, EMBED_DIMS[0], EMBED_DIMS[1]),
         "norm_w": jnp.ones((EMBED_DIMS[1],), jnp.float32),
         "norm_b": jnp.zeros((EMBED_DIMS[1],), jnp.float32)},
        {"db": init_basic_block(kg, EMBED_DIMS[1], EMBED_DIMS[2]),
         "norm_w": jnp.ones((EMBED_DIMS[2],), jnp.float32),
         "norm_b": jnp.zeros((EMBED_DIMS[2],), jnp.float32)},
    ]
    pos = [get_sinusoid_encoding((256 // 4) ** 2, EMBED_DIMS[0]),
           get_sinusoid_encoding((256 // 8) ** 2, EMBED_DIMS[1]),
           get_sinusoid_encoding((256 // 16) ** 2, EMBED_DIMS[2])]
    blocks = [[init_block_params(kg, EMBED_DIMS[s], NUM_HEADS[s],
                                 MLP_RATIOS[s], SR_RATIOS[s])
               for _ in range(DEPTHS[s])] for s in range(3)]
    stage_norm = [{"w": jnp.ones((EMBED_DIMS[s],), jnp.float32),
                   "b": jnp.zeros((EMBED_DIMS[s],), jnp.float32)}
                  for s in range(3)]
    return {"patch_embed": patch_embed, "pos": pos, "blocks": blocks,
            "stage_norm": stage_norm}


# --------------------------------------------------------------------------
# Forward pass (mirrors CT.forward_features; NHWC / (tokens, C) internally)
# --------------------------------------------------------------------------

def conv_block_fwd(p, x_img, stage, pos):
    B = x_img.shape[0]
    if stage == 0:
        xcol, Ho, Wo = im2col_3x3(x_img.astype(jnp.bfloat16), 2)
        y = pallas_matmul_affine(xcol.reshape(B * Ho * Wo, -1), p["conv0_w"],
                                 p["conv0_s"], p["conv0_t"], act=None,
                                 out_dtype=jnp.bfloat16)
        x_img = y.reshape(B, Ho, Wo, 32)
    xcol, Ho, Wo = im2col_3x3(x_img.astype(jnp.bfloat16), 2)
    db = p["db"]
    tok = pallas_patch_embed(xcol.reshape(B * Ho * Wo, -1),
                             db["w1"], db["s1"], db["t1"],
                             db["w2"], db["s2"], db["t2"],
                             p["norm_w"], p["norm_b"], pos)
    C = tok.shape[-1]
    return tok.reshape(B, Ho * Wo, C), Ho, Wo


def block_fwd(p, x, H, W, num_heads, sr_ratio):
    B, N, C = x.shape
    x2 = x.reshape(B * N, C)
    if sr_ratio > 1:
        q, h = pallas_ln_q_h(x2, p["ln1_w"], p["ln1_b"], p["q_w"])
        pooled = maxpool_nhwc(h.reshape(B, H, W, C), sr_ratio)
        pcol, hs, ws = im2col_3x3(pooled, 1)
        kv = pallas_sr_kv(pcol.reshape(B * hs * ws, 9 * C),
                          p["sr_w"], p["sr_s"], p["sr_t"], p["kv_w"])
        Nk = hs * ws
    else:
        q, kv = pallas_ln_qkv(x2, p["ln1_w"], p["ln1_b"], p["qkv_w"])
        Nk = N
    x = pallas_attention(q.reshape(B, N, C), kv.reshape(B, Nk, 2 * C),
                         p["proj_w"], p["proj_b"], x, num_heads=num_heads)
    x2 = pallas_mlp(x.reshape(B * N, C), p["ln2_w"], p["ln2_b"],
                    p["fc1_w"], p["fc1_b"], p["fc2_w"], p["fc2_b"])
    return x2.reshape(B, N, C)


def ct_forward(params, x_nchw):
    x = jnp.transpose(x_nchw, (0, 2, 3, 1))      # NHWC internally
    B = x.shape[0]
    outs = []
    for s in range(3):
        tok, H, W = conv_block_fwd(params["patch_embed"][s], x, s,
                                   params["pos"][s][0])
        for bp in params["blocks"][s]:
            tok = block_fwd(bp, tok, H, W, NUM_HEADS[s], SR_RATIOS[s])
        C = tok.shape[-1]
        tok = pallas_layernorm(tok.reshape(B * H * W, C),
                               params["stage_norm"][s]["w"],
                               params["stage_norm"][s]["b"])
        x = tok.reshape(B, H, W, C)               # next patch embed input
        outs.append(jnp.transpose(x, (0, 3, 1, 2)))   # NCHW (PyTorch layout)
    return outs


# --------------------------------------------------------------------------

if __name__ == "__main__":
    key = jax.random.PRNGKey(0)
    pkey, xkey = jax.random.split(key)
    in_chans = 3
    # 256x256 input is required: the module hard-codes its (frozen) sinusoidal
    # positional tables for 64x64 / 32x32 / 16x16 token grids.
    params = init_ct_params(pkey, in_chans)
    x = jax.random.normal(xkey, (1, in_chans, 256, 256), dtype=jnp.float32)

    outs = ct_forward(params, x)
    for o in outs:
        jax.block_until_ready(o)

    assert outs[0].shape == (1, 64, 64, 64)
    assert outs[1].shape == (1, 128, 32, 32)
    assert outs[2].shape == (1, 256, 16, 16)
    assert all(bool(jnp.all(jnp.isfinite(o))) for o in outs)
    print("KERNEL_OK")
</pallas_src>

<mosaic_0001>
module attributes {stable_mosaic.version = 11 : i64} {
  func.func @_matmul_affine_kernel(%arg0: i32, %arg1: memref<1024x27xbf16, #tpu.memory_space<vmem>>, %arg2: memref<27x32xbf16, #tpu.memory_space<vmem>>, %arg3: memref<1x32xf32, #tpu.memory_space<vmem>>, %arg4: memref<1x32xf32, #tpu.memory_space<vmem>>, %arg5: memref<1024x32xbf16, #tpu.memory_space<vmem>>) attributes {dimension_semantics = [#tpu.dimension_semantics<parallel>], iteration_bounds = array<i64: 16>, scalar_prefetch = 0 : i64, scratch_operands = 0 : i64, tpu.core_type = #tpu.core_type<tc>, window_params = [{transform_indices = @transform_0, window_bounds = array<i64: 1024, 27>}, {pipeline_mode = #tpu.pipeline_mode<synchronous>, transform_indices = @transform_1, window_bounds = array<i64: 27, 32>}, {pipeline_mode = #tpu.pipeline_mode<synchronous>, transform_indices = @transform_2, window_bounds = array<i64: 1, 32>}, {pipeline_mode = #tpu.pipeline_mode<synchronous>, transform_indices = @transform_3, window_bounds = array<i64: 1, 32>}, {transform_indices = @transform_4, window_bounds = array<i64: 1024, 32>}]} {
    %c0 = arith.constant 0 : index
    %c0_0 = arith.constant 0 : index
    %0 = vector.load %arg1[%c0, %c0_0] : memref<1024x27xbf16, #tpu.memory_space<vmem>>, vector<1024x27xbf16>
    %c0_1 = arith.constant 0 : index
    %c0_2 = arith.constant 0 : index
    %1 = vector.load %arg2[%c0_1, %c0_2] : memref<27x32xbf16, #tpu.memory_space<vmem>>, vector<27x32xbf16>
    %cst = arith.constant dense<0.000000e+00> : vector<1024x32xf32>
    %2 = tpu.matmul %0, %1, %cst {dimension_numbers = #tpu.dot_dimension_numbers<[1], [0], [0], [1], [0, 0, 1, 1], [], []>} : vector<1024x27xbf16>, vector<27x32xbf16>, vector<1024x32xf32> -> vector<1024x32xf32>
    %c0_3 = arith.constant 0 : index
    %c0_4 = arith.constant 0 : index
    %3 = vector.load %arg3[%c0_3, %c0_4] : memref<1x32xf32, #tpu.memory_space<vmem>>, vector<1x32xf32>
    %4 = vector.broadcast %3 : vector<1x32xf32> to vector<1024x32xf32>
    %5 = arith.mulf %2, %4 : vector<1024x32xf32>
    %c0_5 = arith.constant 0 : index
    %c0_6 = arith.constant 0 : index
    %6 = vector.load %arg4[%c0_5, %c0_6] : memref<1x32xf32, #tpu.memory_space<vmem>>, vector<1x32xf32>
    %7 = vector.broadcast %6 : vector<1x32xf32> to vector<1024x32xf32>
    %8 = arith.addf %5, %7 : vector<1024x32xf32>
    %9 = arith.truncf %8 : vector<1024x32xf32> to vector<1024x32xbf16>
    %c0_7 = arith.constant 0 : index
    %c0_8 = arith.constant 0 : index
    %10 = vector.load %arg5[%c0_7, %c0_8] : memref<1024x32xbf16, #tpu.memory_space<vmem>>, vector<1024x32xbf16>
    tpu.vector_store %arg5[%c0_7, %c0_8], %9 {strides = array<i32>} : memref<1024x32xbf16, #tpu.memory_space<vmem>>, vector<1024x32xbf16>,
    return
  }
  func.func @transform_0(%arg0: i32) -> (i32, i32) {
    %c0_i32 = arith.constant 0 : i32
    %c0_i32_0 = arith.constant 0 : i32
    return %arg0, %c0_i32 : i32, i32
  }
  func.func @transform_1(%arg0: i32) -> (i32, i32) {
    %c0_i32 = arith.constant 0 : i32
    %c0_i32_0 = arith.constant 0 : i32
    %c0_i32_1 = arith.constant 0 : i32
    return %c0_i32, %c0_i32_0 : i32, i32
  }
  func.func @transform_2(%arg0: i32) -> (i32, i32) {
    %c0_i32 = arith.constant 0 : i32
    %c0_i32_0 = arith.constant 0 : i32
    %c0_i32_1 = arith.constant 0 : i32
    return %c0_i32, %c0_i32_0 : i32, i32
  }
  func.func @transform_3(%arg0: i32) -> (i32, i32) {
    %c0_i32 = arith.constant 0 : i32
    %c0_i32_0 = arith.constant 0 : i32
    %c0_i32_1 = arith.constant 0 : i32
    return %c0_i32, %c0_i32_0 : i32, i32
  }
  func.func @transform_4(%arg0: i32) -> (i32, i32) {
    %c0_i32 = arith.constant 0 : i32
    %c0_i32_0 = arith.constant 0 : i32
    return %arg0, %c0_i32 : i32, i32
  }
}

</mosaic_0001>

<llo_original>
// kernel: pallas_matmul_affine.1
$region0: #{pallas_matmul_affine.1}
  #allocation0 [shape = 'u32[]', space=smem, size = 0x4, offset = 0x4, fixed_abs, tag = 'smem constant byte address 0x4 - core index']
  #allocation1 [shape = 'u32[144,128]{1,0:T(1,128)}', space=vmem, size = 0x12000, scoped, tag = 'internal scratch']
  %s0 = inlined_call_operand.vmem [shape: bf16[16384,27], index: 0, kind: input, shape index: {}]
  %s1 = inlined_call_operand.vmem [shape: bf16[27,32], index: 1, kind: input, shape index: {}]
  %s2 = inlined_call_operand.vmem [shape: f32[1,32], index: 2, kind: input, shape index: {}]
  %s3 = inlined_call_operand.vmem [shape: f32[1,32], index: 3, kind: input, shape index: {}]
  %s4 = inlined_call_operand.vmem [shape: bf16[16384,32], index: 4, kind: output, shape index: {}]
  %s5 = sld [smem:[#allocation0]]
  $region49: #{pallas_matmul_affine.1} parent=0
    _
  %s7 = ssub.s32 1, %s5
  %s8 = scalar_select 0, %s7, %s5
  loop: start=0, step=1, limit=18
  $region2: #{pallas_matmul_affine.1} parent=0 // loop_pre_header
    _
  $region3: #{pallas_matmul_affine.1} parent=0 // loop_header
    %s10 = sphi 0, %s14
    %p11 = scmp.ge.s32.totalorder %s10, 18
    %s20 = sphi 0, %s22
    %s23 = sphi 0, %s20
    %s24 = sphi 0, %s23
    %s40 = sphi 0, %s24
    %s44 = sphi 0, %s44
    %s46 = sphi 0, %s44
    %s47 = sphi 0, %s46
    %s61 = sphi 0, %s47
    %s65 = sphi 0, %s65
    %s67 = sphi 0, %s65
    %s68 = sphi 0, %s67
    %s82 = sphi 0, %s68
    %s86 = sphi 0, %s86
    %s88 = sphi 0, %s86
    %s89 = sphi 0, %s88
    %s103 = sphi 0, %s89
    %s109 = sphi 0, %s111
    %s112 = sphi 0, %s109
    %s113 = sphi 0, %s112
    %s129 = sphi 0, %s113
  $region4: #{pallas_matmul_affine.1} parent=0 // loop_header_branch
    %13 = sbr.rel (%p11) target = $region8
  $region5: #{pallas_matmul_affine.1} parent=0 // loop_body
    %s15 = ssub.s32 %s10, 1
    %s16 = ssub.s32 %s10, 2
    %s17 = sadd.s32 %s10, 1
    %s18 = ssub.s32 %s10, %s17
    %p19 = scmp.eq.s32.totalorder %s18, 0
    %s21 = sadd.s32 %s20, 1
    %s22 = scalar_select %p19, %s20, %s21
    %p25 = pneg %p19
    %p26 = scmp.eq.s32.totalorder %s10, 15
    %p27 = por %p25, %p26
    %p28 = scmp.ne.s32.totalorder %s20, %s23
    %p29 = scmp.eq.s32.totalorder %s10, 0
    %p30 = por %p28, %p29
    %p31 = scmp.ne.s32.totalorder %s20, %s23
    %p32 = scmp.eq.s32.totalorder %s15, 15
    %p33 = por %p31, %p32
    %p34 = scmp.ne.s32.totalorder %s23, %s24
    %p35 = scmp.eq.s32.totalorder %s15, 0
    %p36 = por %p34, %p35
    %p37 = scmp.ne.s32.totalorder %s23, %s24
    %p38 = scmp.eq.s32.totalorder %s16, 15
    %p39 = por %p37, %p38
    %p41 = scmp.ne.s32.totalorder %s24, %s40
    %p42 = scmp.eq.s32.totalorder %s16, 0
    %p43 = por %p41, %p42
    %s45 = sadd.s32 %s44, 1
    %p48 = scmp.eq.s32.totalorder %s10, 15
    %p49 = scmp.ne.s32.totalorder %s44, %s46
    %p50 = scmp.eq.s32.totalorder %s10, 0
    %p51 = por %p49, %p50
    %p52 = scmp.ne.s32.totalorder %s44, %s46
    %p53 = scmp.eq.s32.totalorder %s15, 15
    %p54 = por %p52, %p53
    %p55 = scmp.ne.s32.totalorder %s46, %s47
    %p56 = scmp.eq.s32.totalorder %s15, 0
    %p57 = por %p55, %p56
    %p58 = scmp.ne.s32.totalorder %s46, %s47
    %p59 = scmp.eq.s32.totalorder %s16, 15
    %p60 = por %p58, %p59
    %p62 = scmp.ne.s32.totalorder %s47, %s61
    %p63 = scmp.eq.s32.totalorder %s16, 0
    %p64 = por %p62, %p63
    %s66 = sadd.s32 %s65, 1
    %p69 = scmp.eq.s32.totalorder %s10, 15
    %p70 = scmp.ne.s32.totalorder %s65, %s67
    %p71 = scmp.eq.s32.totalorder %s10, 0
    %p72 = por %p70, %p71
    %p73 = scmp.ne.s32.totalorder %s65, %s67
    %p74 = scmp.eq.s32.totalorder %s15, 15
    %p75 = por %p73, %p74
    %p76 = scmp.ne.s32.totalorder %s67, %s68
    %p77 = scmp.eq.s32.totalorder %s15, 0
    %p78 = por %p76, %p77
    %p79 = scmp.ne.s32.totalorder %s67, %s68
    %p80 = scmp.eq.s32.totalorder %s16, 15
    %p81 = por %p79, %p80
    %p83 = scmp.ne.s32.totalorder %s68, %s82
    %p84 = scmp.eq.s32.totalorder %s16, 0
    %p85 = por %p83, %p84
    %s87 = sadd.s32 %s86, 1
    %p90 = scmp.eq.s32.totalorder %s10, 15
    %p91 = scmp.ne.s32.totalorder %s86, %s88
    %p92 = scmp.eq.s32.totalorder %s10, 0
    %p93 = por %p91, %p92
    %p94 = scmp.ne.s32.totalorder %s86, %s88
    %p95 = scmp.eq.s32.totalorder %s15, 15
    %p96 = por %p94, %p95
    %p97 = scmp.ne.s32.totalorder %s88, %s89
    %p98 = scmp.eq.s32.totalorder %s15, 0
    %p99 = por %p97, %p98
    %p100 = scmp.ne.s32.totalorder %s88, %s89
    %p101 = scmp.eq.s32.totalorder %s16, 15
    %p102 = por %p100, %p101
    %p104 = scmp.ne.s32.totalorder %s89, %s103
    %p105 = scmp.eq.s32.totalorder %s16, 0
    %p106 = por %p104, %p105
    %s107 = ssub.s32 %s10, %s17
    %p108 = scmp.eq.s32.totalorder %s107, 0
    %s110 = sadd.s32 %s109, 1
    %s111 = scalar_select %p108, %s109, %s110
    %p114 = pneg %p108
    %p115 = scmp.eq.s32.totalorder %s10, 15
    %p116 = por %p114, %p115
    %p117 = scmp.ne.s32.totalorder %s109, %s112
    %p118 = scmp.eq.s32.totalorder %s10, 0
    %p119 = por %p117, %p118
    %p120 = scmp.ne.s32.totalorder %s109, %s112
    %p121 = scmp.eq.s32.totalorder %s15, 15
    %p122 = por %p120, %p121
    %p123 = scmp.ne.s32.totalorder %s112, %s113
    %p124 = scmp.eq.s32.totalorder %s15, 0
    %p125 = por %p123, %p124
    %p126 = scmp.ne.s32.totalorder %s112, %s113
    %p127 = scmp.eq.s32.totalorder %s16, 15
    %p128 = por %p126, %p127
    %p130 = scmp.ne.s32.totalorder %s113, %s129
    %p131 = scmp.eq.s32.totalorder %s16, 0
    %p132 = por %p130, %p131
    %p133 = scmp.le.s32.totalorder 1, %s10
    %p134 = scmp.lt.s32.totalorder %s10, 17
    %p135 = pnand %p133, %p134
    %p136 = pneg %p135
    // Predicated region
    $region9: #{pallas_matmul_affine.1} parent=5 // pred_check
      _
    $region10: #{pallas_matmul_affine.1} parent=5 // pred_check_branch
      %138 = sbr.rel (%p135) target = $region12
    $region11: #{pallas_matmul_affine.1} parent=5 // pred_region
      %s139 = ssub.s32 %s10, 1
      // Predicated region
      $region13: #{pallas_matmul_affine.1} parent=11 // pred_check
        %p140 = pneg %p57
      $region14: #{pallas_matmul_affine.1} parent=11 // pred_check_branch
        %142 = sbr.rel (%p140) target = $region16
      $region15: #{pallas_matmul_affine.1} parent=11 // pred_region
        _
      $region16: #{pallas_matmul_affine.1} parent=11 // pred_fallthru
        _
      // Predicated region
      $region17: #{pallas_matmul_affine.1} parent=11 // pred_check
        %p143 = pneg %p78
      $region18: #{pallas_matmul_affine.1} parent=11 // pred_check_branch
        %145 = sbr.rel (%p143) target = $region20
      $region19: #{pallas_matmul_affine.1} parent=11 // pred_region
        _
      $region20: #{pallas_matmul_affine.1} parent=11 // pred_fallthru
        _
      // Predicated region
      $region21: #{pallas_matmul_affine.1} parent=11 // pred_check
        %p146 = pneg %p99
      $region22: #{pallas_matmul_affine.1} parent=11 // pred_check_branch
        %148 = sbr.rel (%p146) target = $region24
      $region23: #{pallas_matmul_affine.1} parent=11 // pred_region
        _
      $region24: #{pallas_matmul_affine.1} parent=11 // pred_fallthru
        _
    $region12: #{pallas_matmul_affine.1} parent=5 // pred_fallthru
      _
    %p149 = scmp.lt.s32.totalorder %s10, 16
    // Predicated region
    $region25: #{pallas_matmul_affine.1} parent=5 // pred_check
      %p150 = pneg %p149
    $region26: #{pallas_matmul_affine.1} parent=5 // pred_check_branch
      %152 = sbr.rel (%p150) target = $region28
    $region27: #{pallas_matmul_affine.1} parent=5 // pred_region
      // Predicated region
      $region29: #{pallas_matmul_affine.1} parent=27 // pred_check
        %p153 = pneg %p30
      $region30: #{pallas_matmul_affine.1} parent=27 // pred_check_branch
        %155 = sbr.rel (%p153) target = $region32
      $region31: #{pallas_matmul_affine.1} parent=27 // pred_region
        %s156 = smul.u32 128, %s10
        %p157 = scmp.lt.s32.totalorder %s156, 2047
        %s158 = scalar_select %p157, %s156, 2047
        %s159 = smul.addr %s158, 4
        %s160 = scalar_lea.vmem %s0, %s159
        %s161 = smul.u32 128, %s10
      $region32: #{pallas_matmul_affine.1} parent=27 // pred_fallthru
        _
    $region28: #{pallas_matmul_affine.1} parent=5 // pred_fallthru
      _
    %p162 = scmp.le.s32.totalorder 1, %s10
    %p163 = scmp.lt.s32.totalorder %s10, 17
    %p164 = pnand %p162, %p163
    %p165 = pneg %p164
    // Predicated region
    $region33: #{pallas_matmul_affine.1} parent=5 // pred_check
      _
    $region34: #{pallas_matmul_affine.1} parent=5 // pred_check_branch
      %167 = sbr.rel (%p164) target = $region36
    $region35: #{pallas_matmul_affine.1} parent=5 // pred_region
      %s168 = ssub.s32 %s10, 1
      %s169 = smul.u32 128, %s15
      %p170 = scmp.lt.s32.totalorder %s169, 2047
      %s171 = scalar_select %p170, %s169, 2047
      %s172 = smul.addr %s171, 4
      %s173 = scalar_lea.vmem %s0, %s172
      %p174 = pneg %p36
      %p175 = pneg %p33
      %p176 = pneg %p57
      %p177 = pneg %p54
      %p178 = pneg %p78
      %p179 = pneg %p75
      %p180 = pneg %p99
      %p181 = pneg %p96
      %p182 = pneg %p125
      %p183 = pneg %p122
      %s184 = smul.u32 128, %s15
      %p185 = scmp.lt.s32.totalorder %s184, 2047
      %s186 = scalar_select %p185, %s184, 2047
      %s187 = smul.addr %s186, 4
      %s188 = scalar_lea.vmem %s4, %s187
      %s189 = smul.u32 128, %s15
      %p190 = scmp.lt.s32.totalorder %s189, 2047
      %s191 = scalar_select %p190, %s189, 2047
      %s192 = smul.addr %s191, 4
      %s193 = scalar_lea.vmem %s0, %s192
      %s194 = smul.u32 128, %s15
      %s195 = smul.u32 128, %s15
      %p196 = scmp.lt.s32.totalorder %s195, 2047
      %s197 = scalar_select %p196, %s195, 2047
      %s198 = smul.addr %s197, 4
      %s199 = scalar_lea.vmem %s4, %s198
      %s200 = smul.u32 128, %s15
      %v202 = vld [vmem:[%s193] sm:$0xf]
      %v203 = vld [vmem:[%s193 + $0x4] sm:$0xf]
      %v204 = vld [vmem:[%s193 + $0x8] sm:$0xf]
      %v205 = vld [vmem:[%s193 + $0xc] sm:$0xf]
      %v206 = vld [vmem:[%s193 + $0x10] sm:$0xf]
      %v207 = vld [vmem:[%s193 + $0x14] sm:$0xf]
      %v208 = vld [vmem:[%s193 + $0x18] sm:$0xf]
      %v209 = vld [vmem:[%s193 + $0x1c] sm:$0xf]
      %v210 = vld [vmem:[%s193 + $0x20] sm:$0xf]
      %v211 = vld [vmem:[%s193 + $0x24] sm:$0xf]
      %v212 = vld [vmem:[%s193 + $0x28] sm:$0xf]
      %v213 = vld [vmem:[%s193 + $0x2c] sm:$0xf]
      %v214 = vld [vmem:[%s193 + $0x30] sm:$0xf]
      %v215 = vld [vmem:[%s193 + $0x34] sm:$0xf]
      %v216 = vld [vmem:[%s193 + $0x38] sm:$0xf]
      %v217 = vld [vmem:[%s193 + $0x3c] sm:$0xf]
      %v218 = vld [vmem:[%s193 + $0x40] sm:$0xf]
      %v219 = vld [vmem:[%s193 + $0x44] sm:$0xf]
      %v220 = vld [vmem:[%s193 + $0x48] sm:$0xf]
      %v221 = vld [vmem:[%s193 + $0x4c] sm:$0xf]
      %v222 = vld [vmem:[%s193 + $0x50] sm:$0xf]
      %v223 = vld [vmem:[%s193 + $0x54] sm:$0xf]
      %v224 = vld [vmem:[%s193 + $0x58] sm:$0xf]
      %v225 = vld [vmem:[%s193 + $0x5c] sm:$0xf]
      %v226 = vld [vmem:[%s193 + $0x60] sm:$0xf]
      %v227 = vld [vmem:[%s193 + $0x64] sm:$0xf]
      %v228 = vld [vmem:[%s193 + $0x68] sm:$0xf]
      %v229 = vld [vmem:[%s193 + $0x6c] sm:$0xf]
      %v230 = vld [vmem:[%s193 + $0x70] sm:$0xf]
      %v231 = vld [vmem:[%s193 + $0x74] sm:$0xf]
      %v232 = vld [vmem:[%s193 + $0x78] sm:$0xf]
      %v233 = vld [vmem:[%s193 + $0x7c] sm:$0xf]
      %v234 = vld [vmem:[%s193 + $0x80] sm:$0xf]
      %v235 = vld [vmem:[%s193 + $0x84] sm:$0xf]
      %v236 = vld [vmem:[%s193 + $0x88] sm:$0xf]
      %v237 = vld [vmem:[%s193 + $0x8c] sm:$0xf]
      %v238 = vld [vmem:[%s193 + $0x90] sm:$0xf]
      %v239 = vld [vmem:[%s193 + $0x94] sm:$0xf]
      %v240 = vld [vmem:[%s193 + $0x98] sm:$0xf]
      %v241 = vld [vmem:[%s193 + $0x9c] sm:$0xf]
      %v242 = vld [vmem:[%s193 + $0xa0] sm:$0xf]
      %v243 = vld [vmem:[%s193 + $0xa4] sm:$0xf]
      %v244 = vld [vmem:[%s193 + $0xa8] sm:$0xf]
      %v245 = vld [vmem:[%s193 + $0xac] sm:$0xf]
      %v246 = vld [vmem:[%s193 + $0xb0] sm:$0xf]
      %v247 = vld [vmem:[%s193 + $0xb4] sm:$0xf]
      %v248 = vld [vmem:[%s193 + $0xb8] sm:$0xf]
      %v249 = vld [vmem:[%s193 + $0xbc] sm:$0xf]
      %v250 = vld [vmem:[%s193 + $0xc0] sm:$0xf]
      %v251 = vld [vmem:[%s193 + $0xc4] sm:$0xf]
      %v252 = vld [vmem:[%s193 + $0xc8] sm:$0xf]
      %v253 = vld [vmem:[%s193 + $0xcc] sm:$0xf]
      %v254 = vld [vmem:[%s193 + $0xd0] sm:$0xf]
      %v255 = vld [vmem:[%s193 + $0xd4] sm:$0xf]
      %v256 = vld [vmem:[%s193 + $0xd8] sm:$0xf]
      %v257 = vld [vmem:[%s193 + $0xdc] sm:$0xf]
      %v258 = vld [vmem:[%s193 + $0xe0] sm:$0xf]
      %v259 = vld [vmem:[%s193 + $0xe4] sm:$0xf]
      %v260 = vld [vmem:[%s193 + $0xe8] sm:$0xf]
      %v261 = vld [vmem:[%s193 + $0xec] sm:$0xf]
      %v262 = vld [vmem:[%s193 + $0xf0] sm:$0xf]
      %v263 = vld [vmem:[%s193 + $0xf4] sm:$0xf]
      %v264 = vld [vmem:[%s193 + $0xf8] sm:$0xf]
      %v265 = vld [vmem:[%s193 + $0xfc] sm:$0xf]
      %v266 = vld [vmem:[%s193 + $0x100] sm:$0xf]
      %v267 = vld [vmem:[%s193 + $0x104] sm:$0xf]
      %v268 = vld [vmem:[%s193 + $0x108] sm:$0xf]
      %v269 = vld [vmem:[%s193 + $0x10c] sm:$0xf]
      %v270 = vld [vmem:[%s193 + $0x110] sm:$0xf]
      %v271 = vld [vmem:[%s193 + $0x114] sm:$0xf]
      %v272 = vld [vmem:[%s193 + $0x118] sm:$0xf]
      %v273 = vld [vmem:[%s193 + $0x11c] sm:$0xf]
      %v274 = vld [vmem:[%s193 + $0x120] sm:$0xf]
      %v275 = vld [vmem:[%s193 + $0x124] sm:$0xf]
      %v276 = vld [vmem:[%s193 + $0x128] sm:$0xf]
      %v277 = vld [vmem:[%s193 + $0x12c] sm:$0xf]
      %v278 = vld [vmem:[%s193 + $0x130] sm:$0xf]
      %v279 = vld [vmem:[%s193 + $0x134] sm:$0xf]
      %v280 = vld [vmem:[%s193 + $0x138] sm:$0xf]
      %v281 = vld [vmem:[%s193 + $0x13c] sm:$0xf]
      %v282 = vld [vmem:[%s193 + $0x140] sm:$0xf]
      %v283 = vld [vmem:[%s193 + $0x144] sm:$0xf]
      %v284 = vld [vmem:[%s193 + $0x148] sm:$0xf]
      %v285 = vld [vmem:[%s193 + $0x14c] sm:$0xf]
      %v286 = vld [vmem:[%s193 + $0x150] sm:$0xf]
      %v287 = vld [vmem:[%s193 + $0x154] sm:$0xf]
      %v288 = vld [vmem:[%s193 + $0x158] sm:$0xf]
      %v289 = vld [vmem:[%s193 + $0x15c] sm:$0xf]
      %v290 = vld [vmem:[%s193 + $0x160] sm:$0xf]
      %v291 = vld [vmem:[%s193 + $0x164] sm:$0xf]
      %v292 = vld [vmem:[%s193 + $0x168] sm:$0xf]
      %v293 = vld [vmem:[%s193 + $0x16c] sm:$0xf]
      %v294 = vld [vmem:[%s193 + $0x170] sm:$0xf]
      %v295 = vld [vmem:[%s193 + $0x174] sm:$0xf]
      %v296 = vld [vmem:[%s193 + $0x178] sm:$0xf]
      %v297 = vld [vmem:[%s193 + $0x17c] sm:$0xf]
      %v298 = vld [vmem:[%s193 + $0x180] sm:$0xf]
      %v299 = vld [vmem:[%s193 + $0x184] sm:$0xf]
      %v300 = vld [vmem:[%s193 + $0x188] sm:$0xf]
      %v301 = vld [vmem:[%s193 + $0x18c] sm:$0xf]
      %v302 = vld [vmem:[%s193 + $0x190] sm:$0xf]
      %v303 = vld [vmem:[%s193 + $0x194] sm:$0xf]
      %v304 = vld [vmem:[%s193 + $0x198] sm:$0xf]
      %v305 = vld [vmem:[%s193 + $0x19c] sm:$0xf]
      %v306 = vld [vmem:[%s193 + $0x1a0] sm:$0xf]
      %v307 = vld [vmem:[%s193 + $0x1a4] sm:$0xf]
      %v308 = vld [vmem:[%s193 + $0x1a8] sm:$0xf]
      %v309 = vld [vmem:[%s193 + $0x1ac] sm:$0xf]
      %v310 = vld [vmem:[%s193 + $0x1b0] sm:$0xf]
      %v311 = vld [vmem:[%s193 + $0x1b4] sm:$0xf]
      %v312 = vld [vmem:[%s193 + $0x1b8] sm:$0xf]
      %v313 = vld [vmem:[%s193 + $0x1bc] sm:$0xf]
      %v314 = vld [vmem:[%s193 + $0x1c0] sm:$0xf]
      %v315 = vld [vmem:[%s193 + $0x1c4] sm:$0xf]
      %v316 = vld [vmem:[%s193 + $0x1c8] sm:$0xf]
      %v317 = vld [vmem:[%s193 + $0x1cc] sm:$0xf]
      %v318 = vld [vmem:[%s193 + $0x1d0] sm:$0xf]
      %v319 = vld [vmem:[%s193 + $0x1d4] sm:$0xf]
      %v320 = vld [vmem:[%s193 + $0x1d8] sm:$0xf]
      %v321 = vld [vmem:[%s193 + $0x1dc] sm:$0xf]
      %v322 = vld [vmem:[%s193 + $0x1e0] sm:$0xf]
      %v323 = vld [vmem:[%s193 + $0x1e4] sm:$0xf]
      %v324 = vld [vmem:[%s193 + $0x1e8] sm:$0xf]
      %v325 = vld [vmem:[%s193 + $0x1ec] sm:$0xf]
      %v326 = vld [vmem:[%s193 + $0x1f0] sm:$0xf]
      %v327 = vld [vmem:[%s193 + $0x1f4] sm:$0xf]
      %v328 = vld [vmem:[%s193 + $0x1f8] sm:$0xf]
      %v329 = vld [vmem:[%s193 + $0x1fc] sm:$0xf]
      %v330 = vld [vmem:[%s1] sm:$0xf]
      %v331 = vld [vmem:[%s1 + $0x4] sm:$0xf]
      %v332 = vld [vmem:[%s1 + $0x8] sm:$0xf]
      %v333 = vld [vmem:[%s1 + $0xc] sm:$0x3]
      %v462 = vunpack.c.l.b16 %v202
      %v463 = vunpack.c.l.b16 %v203
      %v464 = vunpack.c.l.b16 %v204
      %v465 = vunpack.c.l.b16 %v205
      %v466 = vunpack.c.l.b16 %v206
      %v467 = vunpack.c.l.b16 %v207
      %v468 = vunpack.c.l.b16 %v208
      %v469 = vunpack.c.l.b16 %v209
      %v470 = vunpack.c.l.b16 %v210
      %v471 = vunpack.c.l.b16 %v211
      %v472 = vunpack.c.l.b16 %v212
      %v473 = vunpack.c.l.b16 %v213
      %v474 = vunpack.c.l.b16 %v214
      %v475 = vunpack.c.l.b16 %v215
      %v476 = vunpack.c.l.b16 %v216
      %v477 = vunpack.c.l.b16 %v217
      %v478 = vunpack.c.l.b16 %v218
      %v479 = vunpack.c.l.b16 %v219
      %v480 = vunpack.c.l.b16 %v220
      %v481 = vunpack.c.l.b16 %v221
      %v482 = vunpack.c.l.b16 %v222
      %v483 = vunpack.c.l.b16 %v223
      %v484 = vunpack.c.l.b16 %v224
      %v485 = vunpack.c.l.b16 %v225
      %v486 = vunpack.c.l.b16 %v226
      %v487 = vunpack.c.l.b16 %v227
      %v488 = vunpack.c.l.b16 %v228
      %v489 = vunpack.c.l.b16 %v229
      %v490 = vunpack.c.l.b16 %v230
      %v491 = vunpack.c.l.b16 %v231
      %v492 = vunpack.c.l.b16 %v232
      %v493 = vunpack.c.l.b16 %v233
      %v494 = vunpack.c.l.b16 %v234
      %v495 = vunpack.c.l.b16 %v235
      %v496 = vunpack.c.l.b16 %v236
      %v497 = vunpack.c.l.b16 %v237
      %v498 = vunpack.c.l.b16 %v238
      %v499 = vunpack.c.l.b16 %v239
      %v500 = vunpack.c.l.b16 %v240
      %v501 = vunpack.c.l.b16 %v241
      %v502 = vunpack.c.l.b16 %v242
      %v503 = vunpack.c.l.b16 %v243
      %v504 = vunpack.c.l.b16 %v244
      %v505 = vunpack.c.l.b16 %v245
      %v506 = vunpack.c.l.b16 %v246
      %v507 = vunpack.c.l.b16 %v247
      %v508 = vunpack.c.l.b16 %v248
      %v509 = vunpack.c.l.b16 %v249
      %v510 = vunpack.c.l.b16 %v250
      %v511 = vunpack.c.l.b16 %v251
      %v512 = vunpack.c.l.b16 %v252
      %v513 = vunpack.c.l.b16 %v253
      %v514 = vunpack.c.l.b16 %v254
      %v515 = vunpack.c.l.b16 %v255
      %v516 = vunpack.c.l.b16 %v256
      %v517 = vunpack.c.l.b16 %v257
      %v518 = vunpack.c.l.b16 %v258
      %v519 = vunpack.c.l.b16 %v259
      %v520 = vunpack.c.l.b16 %v260
      %v521 = vunpack.c.l.b16 %v261
      %v522 = vunpack.c.l.b16 %v262
      %v523 = vunpack.c.l.b16 %v263
      %v524 = vunpack.c.l.b16 %v264
      %v525 = vunpack.c.l.b16 %v265
      %v526 = vunpack.c.l.b16 %v266
      %v527 = vunpack.c.l.b16 %v267
      %v528 = vunpack.c.l.b16 %v268
      %v529 = vunpack.c.l.b16 %v269
      %v530 = vunpack.c.l.b16 %v270
      %v531 = vunpack.c.l.b16 %v271
      %v532 = vunpack.c.l.b16 %v272
      %v533 = vunpack.c.l.b16 %v273
      %v534 = vunpack.c.l.b16 %v274
      %v535 = vunpack.c.l.b16 %v275
      %v536 = vunpack.c.l.b16 %v276
      %v537 = vunpack.c.l.b16 %v277
      %v538 = vunpack.c.l.b16 %v278
      %v539 = vunpack.c.l.b16 %v279
      %v540 = vunpack.c.l.b16 %v280
      %v541 = vunpack.c.l.b16 %v281
      %v542 = vunpack.c.l.b16 %v282
      %v543 = vunpack.c.l.b16 %v283
      %v544 = vunpack.c.l.b16 %v284
      %v545 = vunpack.c.l.b16 %v285
      %v546 = vunpack.c.l.b16 %v286
      %v547 = vunpack.c.l.b16 %v287
      %v548 = vunpack.c.l.b16 %v288
      %v549 = vunpack.c.l.b16 %v289
      %v550 = vunpack.c.l.b16 %v290
      %v551 = vunpack.c.l.b16 %v291
      %v552 = vunpack.c.l.b16 %v292
      %v553 = vunpack.c.l.b16 %v293
      %v554 = vunpack.c.l.b16 %v294
      %v555 = vunpack.c.l.b16 %v295
      %v556 = vunpack.c.l.b16 %v296
      %v557 = vunpack.c.l.b16 %v297
      %v558 = vunpack.c.l.b16 %v298
      %v559 = vunpack.c.l.b16 %v299
      %v560 = vunpack.c.l.b16 %v300
      %v561 = vunpack.c.l.b16 %v301
      %v562 = vunpack.c.l.b16 %v302
      %v563 = vunpack.c.l.b16 %v303
      %v564 = vunpack.c.l.b16 %v304
      %v565 = vunpack.c.l.b16 %v305
      %v566 = vunpack.c.l.b16 %v306
      %v567 = vunpack.c.l.b16 %v307
      %v568 = vunpack.c.l.b16 %v308
      %v569 = vunpack.c.l.b16 %v309
      %v570 = vunpack.c.l.b16 %v310
      %v571 = vunpack.c.l.b16 %v311
      %v572 = vunpack.c.l.b16 %v312
      %v573 = vunpack.c.l.b16 %v313
      %v574 = vunpack.c.l.b16 %v314
      %v575 = vunpack.c.l.b16 %v315
      %v576 = vunpack.c.l.b16 %v316
      %v577 = vunpack.c.l.b16 %v317
      %v578 = vunpack.c.l.b16 %v318
      %v579 = vunpack.c.l.b16 %v319
      %v580 = vunpack.c.l.b16 %v320
      %v581 = vunpack.c.l.b16 %v321
      %v582 = vunpack.c.l.b16 %v322
      %v583 = vunpack.c.l.b16 %v323
      %v584 = vunpack.c.l.b16 %v324
      %v585 = vunpack.c.l.b16 %v325
      %v586 = vunpack.c.l.b16 %v326
      %v587 = vunpack.c.l.b16 %v327
      %v588 = vunpack.c.l.b16 %v328
      %v589 = vunpack.c.l.b16 %v329
      %v590 = vpack.c.b16 %v463, %v462
      %v591 = vpack.c.b16 %v465, %v464
      %v592 = vpack.c.b16 %v467, %v466
      %v593 = vpack.c.b16 %v469, %v468
      %v594 = vpack.c.b16 %v471, %v470
      %v595 = vpack.c.b16 %v473, %v472
      %v596 = vpack.c.b16 %v475, %v474
      %v597 = vpack.c.b16 %v477, %v476
      %v598 = vpack.c.b16 %v479, %v478
      %v599 = vpack.c.b16 %v481, %v480
      %v600 = vpack.c.b16 %v483, %v482
      %v601 = vpack.c.b16 %v485, %v484
      %v602 = vpack.c.b16 %v487, %v486
      %v603 = vpack.c.b16 %v489, %v488
      %v604 = vpack.c.b16 %v491, %v490
      %v605 = vpack.c.b16 %v493, %v492
      %v606 = vpack.c.b16 %v495, %v494
      %v607 = vpack.c.b16 %v497, %v496
      %v608 = vpack.c.b16 %v499, %v498
      %v609 = vpack.c.b16 %v501, %v500
      %v610 = vpack.c.b16 %v503, %v502
      %v611 = vpack.c.b16 %v505, %v504
      %v612 = vpack.c.b16 %v507, %v506
      %v613 = vpack.c.b16 %v509, %v508
      %v614 = vpack.c.b16 %v511, %v510
      %v615 = vpack.c.b16 %v513, %v512
      %v616 = vpack.c.b16 %v515, %v514
      %v617 = vpack.c.b16 %v517, %v516
      %v618 = vpack.c.b16 %v519, %v518
      %v619 = vpack.c.b16 %v521, %v520
      %v620 = vpack.c.b16 %v523, %v522
      %v621 = vpack.c.b16 %v525, %v524
      %v622 = vpack.c.b16 %v527, %v526
      %v623 = vpack.c.b16 %v529, %v528
      %v624 = vpack.c.b16 %v531, %v530
      %v625 = vpack.c.b16 %v533, %v532
      %v626 = vpack.c.b16 %v535, %v534
      %v627 = vpack.c.b16 %v537, %v536
      %v628 = vpack.c.b16 %v539, %v538
      %v629 = vpack.c.b16 %v541, %v540
      %v630 = vpack.c.b16 %v543, %v542
      %v631 = vpack.c.b16 %v545, %v544
      %v632 = vpack.c.b16 %v547, %v546
      %v633 = vpack.c.b16 %v549, %v548
      %v634 = vpack.c.b16 %v551, %v550
      %v635 = vpack.c.b16 %v553, %v552
      %v636 = vpack.c.b16 %v555, %v554
      %v637 = vpack.c.b16 %v557, %v556
      %v638 = vpack.c.b16 %v559, %v558
      %v639 = vpack.c.b16 %v561, %v560
      %v640 = vpack.c.b16 %v563, %v562
      %v641 = vpack.c.b16 %v565, %v564
      %v642 = vpack.c.b16 %v567, %v566
      %v643 = vpack.c.b16 %v569, %v568
      %v644 = vpack.c.b16 %v571, %v570
      %v645 = vpack.c.b16 %v573, %v572
      %v646 = vpack.c.b16 %v575, %v574
      %v647 = vpack.c.b16 %v577, %v576
      %v648 = vpack.c.b16 %v579, %v578
      %v649 = vpack.c.b16 %v581, %v580
      %v650 = vpack.c.b16 %v583, %v582
      %v651 = vpack.c.b16 %v585, %v584
      %v652 = vpack.c.b16 %v587, %v586
      %v653 = vpack.c.b16 %v589, %v588
      %v658 = vunpack.c.l.b16 %v330
      %v659 = vunpack.c.l.b16 %v331
      %v660 = vunpack.c.l.b16 %v332
      %v661 = vunpack.c.l.b16 %v333
      %v662 = vpack.c.b16 %v659, %v658
      %v663 = vpack.c.b16 %v661, %v660
      %vm665 = vcmask 220160
      %v667 = vsel %vm665, %v590, 0
      %v670 = vsel %vm665, %v591, 0
      %v673 = vsel %vm665, %v592, 0
      %v676 = vsel %vm665, %v593, 0
      %v679 = vsel %vm665, %v594, 0
      %v682 = vsel %vm665, %v595, 0
      %v685 = vsel %vm665, %v596, 0
      %v688 = vsel %vm665, %v597, 0
      %v691 = vsel %vm665, %v598, 0
      %v694 = vsel %vm665, %v599, 0
      %v697 = vsel %vm665, %v600, 0
      %v700 = vsel %vm665, %v601, 0
      %v703 = vsel %vm665, %v602, 0
      %v706 = vsel %vm665, %v603, 0
      %v709 = vsel %vm665, %v604, 0
      %v712 = vsel %vm665, %v605, 0
      %v715 = vsel %vm665, %v606, 0
      %v718 = vsel %vm665, %v607, 0
      %v721 = vsel %vm665, %v608, 0
      %v724 = vsel %vm665, %v609, 0
      %v727 = vsel %vm665, %v610, 0
      %v730 = vsel %vm665, %v611, 0
      %v733 = vsel %vm665, %v612, 0
      %v736 = vsel %vm665, %v613, 0
      %v739 = vsel %vm665, %v614, 0
      %v742 = vsel %vm665, %v615, 0
      %v745 = vsel %vm665, %v616, 0
      %v748 = vsel %vm665, %v617, 0
      %v751 = vsel %vm665, %v618, 0
      %v754 = vsel %vm665, %v619, 0
      %v757 = vsel %vm665, %v620, 0
      %v760 = vsel %vm665, %v621, 0
      %v763 = vsel %vm665, %v622, 0
      %v766 = vsel %vm665, %v623, 0
      %v769 = vsel %vm665, %v624, 0
      %v772 = vsel %vm665, %v625, 0
      %v775 = vsel %vm665, %v626, 0
      %v778 = vsel %vm665, %v627, 0
      %v781 = vsel %vm665, %v628, 0
      %v784 = vsel %vm665, %v629, 0
      %v787 = vsel %vm665, %v630, 0
      %v790 = vsel %vm665, %v631, 0
      %v793 = vsel %vm665, %v632, 0
      %v796 = vsel %vm665, %v633, 0
      %v799 = vsel %vm665, %v634, 0
      %v802 = vsel %vm665, %v635, 0
      %v805 = vsel %vm665, %v636, 0
      %v808 = vsel %vm665, %v637, 0
      %v811 = vsel %vm665, %v638, 0
      %v814 = vsel %vm665, %v639, 0
      %v817 = vsel %vm665, %v640, 0
      %v820 = vsel %vm665, %v641, 0
      %v823 = vsel %vm665, %v642, 0
      %v826 = vsel %vm665, %v643, 0
      %v829 = vsel %vm665, %v644, 0
      %v832 = vsel %vm665, %v645, 0
      %v835 = vsel %vm665, %v646, 0
      %v838 = vsel %vm665, %v647, 0
      %v841 = vsel %vm665, %v648, 0
      %v844 = vsel %vm665, %v649, 0
      %v847 = vsel %vm665, %v650, 0
      %v850 = vsel %vm665, %v651, 0
      %v853 = vsel %vm665, %v652, 0
      %v856 = vsel %vm665, %v653, 0
      %vm858 = vcmask 1044480
      %vm859 = vcmask 1045504
      %v860 = vsel %vm858, 4294967295, 65535
      %v861 = vsel %vm859, %v860, 0
      %v863 = vand.u32 %v663, %v861
      %865 = vmatprep.subr.bf16.mxu0 0
      %866 = vmatpush1.bf16.msra.mxu0 0
      %867 = vmatprep.subr.bf16.mxu0 0
      %868 = vmatpush1.bf16.msra.mxu0 0
      %869 = vmatprep.subr.bf16.mxu0 0
      %870 = vmatpush1.bf16.msra.mxu0 0
      %871 = vmatprep.subr.bf16.mxu0 0
      %872 = vmatpush1.bf16.msra.mxu0 0
      %873 = vmatprep.subr.bf16.mxu0 0
      %874 = vmatpush1.bf16.msra.mxu0 0
      %875 = vmatprep.subr.bf16.mxu0 0
      %876 = vmatpush1.bf16.msra.mxu0 0
      %877 = vmatprep.subr.bf16.mxu0 0
      %878 = vmatpush1.bf16.msra.mxu0 %v863
      %879 = vmatprep.subr.bf16.mxu0 0
      %880 = vmatpush1.bf16.msra.mxu0 %v662
      %881 = vmatprep.subr.bf16.mxu0 0
      %882 = vmatpush2.bf16.msra.mxu0 0
      %883 = vmatprep.subr.bf16.mxu0 0
      %884 = vmatpush2.bf16.msra.mxu0 0
      %885 = vmatprep.subr.bf16.mxu0 0
      %886 = vmatpush2.bf16.msra.mxu0 0
      %887 = vmatprep.subr.bf16.mxu0 0
      %888 = vmatpush2.bf16.msra.mxu0 0
      %889 = vmatprep.subr.bf16.mxu0 0
      %890 = vmatpush2.bf16.msra.mxu0 0
      %891 = vmatprep.subr.bf16.mxu0 0
      %892 = vmatpush2.bf16.msra.mxu0 0
      %893 = vmatprep.subr.bf16.mxu0 0
      %894 = vmatpush2.bf16.msra.mxu0 0
      %895 = vmatprep.subr.bf16.mxu0 0
      %896 = vmatpush2.bf16.msra.mxu0 0
      %897 = vmatprep.mubr.bf16.mxu0 0
      %898 = vmatmul.mubr.bf16.gmra.mxu0 %v667
      %v899 = vpop.f32.mrf.mxu0
      %v900 = vadd.f32 0.0, %v899
      %v901 = vpop.f32.mrf.mxu0
      %v902 = vpop.f32.mrf.mxu0
      %v903 = vadd.f32 0.0, %v902
      %v904 = vpop.f32.mrf.mxu0
      %905 = vmatprep.mubr.bf16.mxu0 0
      %906 = vmatmul.mubr.bf16.gmra.mxu0 %v670
      %v907 = vpop.f32.mrf.mxu0
      %v908 = vadd.f32 0.0, %v907
      %v909 = vpop.f32.mrf.mxu0
      %v910 = vpop.f32.mrf.mxu0
      %v911 = vadd.f32 0.0, %v910
      %v912 = vpop.f32.mrf.mxu0
      %913 = vmatprep.mubr.bf16.mxu0 0
      %914 = vmatmul.mubr.bf16.gmra.mxu0 %v673
      %v915 = vpop.f32.mrf.mxu0
      %v916 = vadd.f32 0.0, %v915
      %v917 = vpop.f32.mrf.mxu0
      %v918 = vpop.f32.mrf.mxu0
      %v919 = vadd.f32 0.0, %v918
      %v920 = vpop.f32.mrf.mxu0
      %921 = vmatprep.mubr.bf16.mxu0 0
      %922 = vmatmul.mubr.bf16.gmra.mxu0 %v676
      %v923 = vpop.f32.mrf.mxu0
      %v924 = vadd.f32 0.0, %v923
      %v925 = vpop.f32.mrf.mxu0
      %v926 = vpop.f32.mrf.mxu0
      %v927 = vadd.f32 0.0, %v926
      %v928 = vpop.f32.mrf.mxu0
      %929 = vmatprep.mubr.bf16.mxu0 0
      %930 = vmatmul.mubr.bf16.gmra.mxu0 %v679
      %v931 = vpop.f32.mrf.mxu0
      %v932 = vadd.f32 0.0, %v931
      %v933 = vpop.f32.mrf.mxu0
      %v934 = vpop.f32.mrf.mxu0
      %v935 = vadd.f32 0.0, %v934
      %v936 = vpop.f32.mrf.mxu0
      %937 = vmatprep.mubr.bf16.mxu0 0
      %938 = vmatmul.mubr.bf16.gmra.mxu0 %v682
      %v939 = vpop.f32.mrf.mxu0
      %v940 = vadd.f32 0.0, %v939
      %v941 = vpop.f32.mrf.mxu0
      %v942 = vpop.f32.mrf.mxu0
      %v943 = vadd.f32 0.0, %v942
      %v944 = vpop.f32.mrf.mxu0
      %945 = vmatprep.mubr.bf16.mxu0 0
      %946 = vmatmul.mubr.bf16.gmra.mxu0 %v685
      %v947 = vpop.f32.mrf.mxu0
      %v948 = vadd.f32 0.0, %v947
      %v949 = vpop.f32.mrf.mxu0
      %v950 = vpop.f32.mrf.mxu0
      %v951 = vadd.f32 0.0, %v950
      %v952 = vpop.f32.mrf.mxu0
      %953 = vmatprep.mubr.bf16.mxu0 0
      %954 = vmatmul.mubr.bf16.gmra.mxu0 %v688
      %v955 = vpop.f32.mrf.mxu0
      %v956 = vadd.f32 0.0, %v955
      %v957 = vpop.f32.mrf.mxu0
      %v958 = vpop.f32.mrf.mxu0
      %v959 = vadd.f32 0.0, %v958
      %v960 = vpop.f32.mrf.mxu0
      %961 = vmatprep.mubr.bf16.mxu0 0
      %962 = vmatmul.mubr.bf16.gmra.mxu0 %v691
      %v963 = vpop.f32.mrf.mxu0
      %v964 = vadd.f32 0.0, %v963
      %v965 = vpop.f32.mrf.mxu0
      %v966 = vpop.f32.mrf.mxu0
      %v967 = vadd.f32 0.0, %v966
      %v968 = vpop.f32.mrf.mxu0
      %969 = vmatprep.mubr.bf16.mxu0 0
      %970 = vmatmul.mubr.bf16.gmra.mxu0 %v694
      %v971 = vpop.f32.mrf.mxu0
      %v972 = vadd.f32 0.0, %v971
      %v973 = vpop.f32.mrf.mxu0
      %v974 = vpop.f32.mrf.mxu0
      %v975 = vadd.f32 0.0, %v974
      %v976 = vpop.f32.mrf.mxu0
      %977 = vmatprep.mubr.bf16.mxu0 0
      %978 = vmatmul.mubr.bf16.gmra.mxu0 %v697
      %v979 = vpop.f32.mrf.mxu0
      %v980 = vadd.f32 0.0, %v979
      %v981 = vpop.f32.mrf.mxu0
      %v982 = vpop.f32.mrf.mxu0
      %v983 = vadd.f32 0.0, %v982
      %v984 = vpop.f32.mrf.mxu0
      %985 = vmatprep.mubr.bf16.mxu0 0
      %986 = vmatmul.mubr.bf16.gmra.mxu0 %v700
      %v987 = vpop.f32.mrf.mxu0
      %v988 = vadd.f32 0.0, %v987
      %v989 = vpop.f32.mrf.mxu0
      %v990 = vpop.f32.mrf.mxu0
      %v991 = vadd.f32 0.0, %v990
      %v992 = vpop.f32.mrf.mxu0
      %993 = vmatprep.mubr.bf16.mxu0 0
      %994 = vmatmul.mubr.bf16.gmra.mxu0 %v703
      %v995 = vpop.f32.mrf.mxu0
      %v996 = vadd.f32 0.0, %v995
      %v997 = vpop.f32.mrf.mxu0
      %v998 = vpop.f32.mrf.mxu0
      %v999 = vadd.f32 0.0, %v998
      %v1000 = vpop.f32.mrf.mxu0
      %1001 = vmatprep.mubr.bf16.mxu0 0
      %1002 = vmatmul.mubr.bf16.gmra.mxu0 %v706
      %v1003 = vpop.f32.mrf.mxu0
      %v1004 = vadd.f32 0.0, %v1003
      %v1005 = vpop.f32.mrf.mxu0
      %v1006 = vpop.f32.mrf.mxu0
      %v1007 = vadd.f32 0.0, %v1006
      %v1008 = vpop.f32.mrf.mxu0
      %1009 = vmatprep.mubr.bf16.mxu0 0
      %1010 = vmatmul.mubr.bf16.gmra.mxu0 %v709
      %v1011 = vpop.f32.mrf.mxu0
      %v1012 = vadd.f32 0.0, %v1011
      %v1013 = vpop.f32.mrf.mxu0
      %v1014 = vpop.f32.mrf.mxu0
      %v1015 = vadd.f32 0.0, %v1014
      %v1016 = vpop.f32.mrf.mxu0
      %1017 = vmatprep.mubr.bf16.mxu0 0
      %1018 = vmatmul.mubr.bf16.gmra.mxu0 %v712
      %v1019 = vpop.f32.mrf.mxu0
      %v1020 = vadd.f32 0.0, %v1019
      %v1021 = vpop.f32.mrf.mxu0
      %v1022 = vpop.f32.mrf.mxu0
      %v1023 = vadd.f32 0.0, %v1022
      %v1024 = vpop.f32.mrf.mxu0
      %1025 = vmatprep.mubr.bf16.mxu0 0
      %1026 = vmatmul.mubr.bf16.gmra.mxu0 %v715
      %v1027 = vpop.f32.mrf.mxu0
      %v1028 = vadd.f32 0.0, %v1027
      %v1029 = vpop.f32.mrf.mxu0
      %v1030 = vpop.f32.mrf.mxu0
      %v1031 = vadd.f32 0.0, %v1030
      %v1032 = vpop.f32.mrf.mxu0
      %1033 = vmatprep.mubr.bf16.mxu0 0
      %1034 = vmatmul.mubr.bf16.gmra.mxu0 %v718
      %v1035 = vpop.f32.mrf.mxu0
      %v1036 = vadd.f32 0.0, %v1035
      %v1037 = vpop.f32.mrf.mxu0
      %v1038 = vpop.f32.mrf.mxu0
      %v1039 = vadd.f32 0.0, %v1038
      %v1040 = vpop.f32.mrf.mxu0
      %1041 = vmatprep.mubr.bf16.mxu0 0
      %1042 = vmatmul.mubr.bf16.gmra.mxu0 %v721
      %v1043 = vpop.f32.mrf.mxu0
      %v1044 = vadd.f32 0.0, %v1043
      %v1045 = vpop.f32.mrf.mxu0
      %v1046 = vpop.f32.mrf.mxu0
      %v1047 = vadd.f32 0.0, %v1046
      %v1048 = vpop.f32.mrf.mxu0
      %1049 = vmatprep.mubr.bf16.mxu0 0
      %1050 = vmatmul.mubr.bf16.gmra.mxu0 %v724
      %v1051 = vpop.f32.mrf.mxu0
      %v1052 = vadd.f32 0.0, %v1051
      %v1053 = vpop.f32.mrf.mxu0
      %v1054 = vpop.f32.mrf.mxu0
      %v1055 = vadd.f32 0.0, %v1054
      %v1056 = vpop.f32.mrf.mxu0
      %1057 = vmatprep.mubr.bf16.mxu0 0
      %1058 = vmatmul.mubr.bf16.gmra.mxu0 %v727
      %v1059 = vpop.f32.mrf.mxu0
      %v1060 = vadd.f32 0.0, %v1059
      %v1061 = vpop.f32.mrf.mxu0
      %v1062 = vpop.f32.mrf.mxu0
      %v1063 = vadd.f32 0.0, %v1062
      %v1064 = vpop.f32.mrf.mxu0
      %1065 = vmatprep.mubr.bf16.mxu0 0
      %1066 = vmatmul.mubr.bf16.gmra.mxu0 %v730
      %v1067 = vpop.f32.mrf.mxu0
      %v1068 = vadd.f32 0.0, %v1067
      %v1069 = vpop.f32.mrf.mxu0
      %v1070 = vpop.f32.mrf.mxu0
      %v1071 = vadd.f32 0.0, %v1070
      %v1072 = vpop.f32.mrf.mxu0
      %1073 = vmatprep.mubr.bf16.mxu0 0
      %1074 = vmatmul.mubr.bf16.gmra.mxu0 %v733
      %v1075 = vpop.f32.mrf.mxu0
      %v1076 = vadd.f32 0.0, %v1075
      %v1077 = vpop.f32.mrf.mxu0
      %v1078 = vpop.f32.mrf.mxu0
      %v1079 = vadd.f32 0.0, %v1078
      %v1080 = vpop.f32.mrf.mxu0
      %1081 = vmatprep.mubr.bf16.mxu0 0
      %1082 = vmatmul.mubr.bf16.gmra.mxu0 %v736
      %v1083 = vpop.f32.mrf.mxu0
      %v1084 = vadd.f32 0.0, %v1083
      %v1085 = vpop.f32.mrf.mxu0
      %v1086 = vpop.f32.mrf.mxu0
      %v1087 = vadd.f32 0.0, %v1086
      %v1088 = vpop.f32.mrf.mxu0
      %1089 = vmatprep.mubr.bf16.mxu0 0
      %1090 = vmatmul.mubr.bf16.gmra.mxu0 %v739
      %v1091 = vpop.f32.mrf.mxu0
      %v1092 = vadd.f32 0.0, %v1091
      %v1093 = vpop.f32.mrf.mxu0
      %v1094 = vpop.f32.mrf.mxu0
      %v1095 = vadd.f32 0.0, %v1094
      %v1096 = vpop.f32.mrf.mxu0
      %1097 = vmatprep.mubr.bf16.mxu0 0
      %1098 = vmatmul.mubr.bf16.gmra.mxu0 %v742
      %v1099 = vpop.f32.mrf.mxu0
      %v1100 = vadd.f32 0.0, %v1099
      %v1101 = vpop.f32.mrf.mxu0
      %v1102 = vpop.f32.mrf.mxu0
      %v1103 = vadd.f32 0.0, %v1102
      %v1104 = vpop.f32.mrf.mxu0
      %1105 = vmatprep.mubr.bf16.mxu0 0
      %1106 = vmatmul.mubr.bf16.gmra.mxu0 %v745
      %v1107 = vpop.f32.mrf.mxu0
      %v1108 = vadd.f32 0.0, %v1107
      %v1109 = vpop.f32.mrf.mxu0
      %v1110 = vpop.f32.mrf.mxu0
      %v1111 = vadd.f32 0.0, %v1110
      %v1112 = vpop.f32.mrf.mxu0
      %1113 = vmatprep.mubr.bf16.mxu0 0
      %1114 = vmatmul.mubr.bf16.gmra.mxu0 %v748
      %v1115 = vpop.f32.mrf.mxu0
      %v1116 = vadd.f32 0.0, %v1115
      %v1117 = vpop.f32.mrf.mxu0
      %v1118 = vpop.f32.mrf.mxu0
      %v1119 = vadd.f32 0.0, %v1118
      %v1120 = vpop.f32.mrf.mxu0
      %1121 = vmatprep.mubr.bf16.mxu0 0
      %1122 = vmatmul.mubr.bf16.gmra.mxu0 %v751
      %v1123 = vpop.f32.mrf.mxu0
      %v1124 = vadd.f32 0.0, %v1123
      %v1125 = vpop.f32.mrf.mxu0
      %v1126 = vpop.f32.mrf.mxu0
      %v1127 = vadd.f32 0.0, %v1126
      %v1128 = vpop.f32.mrf.mxu0
      %1129 = vmatprep.mubr.bf16.mxu0 0
      %1130 = vmatmul.mubr.bf16.gmra.mxu0 %v754
      %v1131 = vpop.f32.mrf.mxu0
      %v1132 = vadd.f32 0.0, %v1131
      %v1133 = vpop.f32.mrf.mxu0
      %v1134 = vpop.f32.mrf.mxu0
      %v1135 = vadd.f32 0.0, %v1134
      %v1136 = vpop.f32.mrf.mxu0
      %1137 = vmatprep.mubr.bf16.mxu0 0
      %1138 = vmatmul.mubr.bf16.gmra.mxu0 %v757
      %v1139 = vpop.f32.mrf.mxu0
      %v1140 = vadd.f32 0.0, %v1139
      %v1141 = vpop.f32.mrf.mxu0
      %v1142 = vpop.f32.mrf.mxu0
      %v1143 = vadd.f32 0.0, %v1142
      %v1144 = vpop.f32.mrf.mxu0
      %1145 = vmatprep.mubr.bf16.mxu0 0
      %1146 = vmatmul.mubr.bf16.gmra.mxu0 %v760
      %v1147 = vpop.f32.mrf.mxu0
      %v1148 = vadd.f32 0.0, %v1147
      %v1149 = vpop.f32.mrf.mxu0
      %v1150 = vpop.f32.mrf.mxu0
      %v1151 = vadd.f32 0.0, %v1150
      %v1152 = vpop.f32.mrf.mxu0
      %1153 = vmatprep.mubr.bf16.mxu0 0
      %1154 = vmatmul.mubr.bf16.gmra.mxu0 %v763
      %v1155 = vpop.f32.mrf.mxu0
      %v1156 = vadd.f32 0.0, %v1155
      %v1157 = vpop.f32.mrf.mxu0
      %v1158 = vpop.f32.mrf.mxu0
      %v1159 = vadd.f32 0.0, %v1158
      %v1160 = vpop.f32.mrf.mxu0
      %1161 = vmatprep.mubr.bf16.mxu0 0
      %1162 = vmatmul.mubr.bf16.gmra.mxu0 %v766
      %v1163 = vpop.f32.mrf.mxu0
      %v1164 = vadd.f32 0.0, %v1163
      %v1165 = vpop.f32.mrf.mxu0
      %v1166 = vpop.f32.mrf.mxu0
      %v1167 = vadd.f32 0.0, %v1166
      %v1168 = vpop.f32.mrf.mxu0
      %1169 = vmatprep.mubr.bf16.mxu0 0
      %1170 = vmatmul.mubr.bf16.gmra.mxu0 %v769
      %v1171 = vpop.f32.mrf.mxu0
      %v1172 = vadd.f32 0.0, %v1171
      %v1173 = vpop.f32.mrf.mxu0
      %v1174 = vpop.f32.mrf.mxu0
      %v1175 = vadd.f32 0.0, %v1174
      %v1176 = vpop.f32.mrf.mxu0
      %1177 = vmatprep.mubr.bf16.mxu0 0
      %1178 = vmatmul.mubr.bf16.gmra.mxu0 %v772
      %v1179 = vpop.f32.mrf.mxu0
      %v1180 = vadd.f32 0.0, %v1179
      %v1181 = vpop.f32.mrf.mxu0
      %v1182 = vpop.f32.mrf.mxu0
      %v1183 = vadd.f32 0.0, %v1182
      %v1184 = vpop.f32.mrf.mxu0
      %1185 = vmatprep.mubr.bf16.mxu0 0
      %1186 = vmatmul.mubr.bf16.gmra.mxu0 %v775
      %v1187 = vpop.f32.mrf.mxu0
      %v1188 = vadd.f32 0.0, %v1187
      %v1189 = vpop.f32.mrf.mxu0
      %v1190 = vpop.f32.mrf.mxu0
      %v1191 = vadd.f32 0.0, %v1190
      %v1192 = vpop.f32.mrf.mxu0
      %1193 = vmatprep.mubr.bf16.mxu0 0
      %1194 = vmatmul.mubr.bf16.gmra.mxu0 %v778
      %v1195 = vpop.f32.mrf.mxu0
      %v1196 = vadd.f32 0.0, %v1195
      %v1197 = vpop.f32.mrf.mxu0
      %v1198 = vpop.f32.mrf.mxu0
      %v1199 = vadd.f32 0.0, %v1198
      %v1200 = vpop.f32.mrf.mxu0
      %1201 = vmatprep.mubr.bf16.mxu0 0
      %1202 = vmatmul.mubr.bf16.gmra.mxu0 %v781
      %v1203 = vpop.f32.mrf.mxu0
      %v1204 = vadd.f32 0.0, %v1203
      %v1205 = vpop.f32.mrf.mxu0
      %v1206 = vpop.f32.mrf.mxu0
      %v1207 = vadd.f32 0.0, %v1206
      %v1208 = vpop.f32.mrf.mxu0
      %1209 = vmatprep.mubr.bf16.mxu0 0
      %1210 = vmatmul.mubr.bf16.gmra.mxu0 %v784
      %v1211 = vpop.f32.mrf.mxu0
      %v1212 = vadd.f32 0.0, %v1211
      %v1213 = vpop.f32.mrf.mxu0
      %v1214 = vpop.f32.mrf.mxu0
      %v1215 = vadd.f32 0.0, %v1214
      %v1216 = vpop.f32.mrf.mxu0
      %1217 = vmatprep.mubr.bf16.mxu0 0
      %1218 = vmatmul.mubr.bf16.gmra.mxu0 %v787
      %v1219 = vpop.f32.mrf.mxu0
      %v1220 = vadd.f32 0.0, %v1219
      %v1221 = vpop.f32.mrf.mxu0
      %v1222 = vpop.f32.mrf.mxu0
      %v1223 = vadd.f32 0.0, %v1222
      %v1224 = vpop.f32.mrf.mxu0
      %1225 = vmatprep.mubr.bf16.mxu0 0
      %1226 = vmatmul.mubr.bf16.gmra.mxu0 %v790
      %v1227 = vpop.f32.mrf.mxu0
      %v1228 = vadd.f32 0.0, %v1227
      %v1229 = vpop.f32.mrf.mxu0
      %v1230 = vpop.f32.mrf.mxu0
      %v1231 = vadd.f32 0.0, %v1230
      %v1232 = vpop.f32.mrf.mxu0
      %1233 = vmatprep.mubr.bf16.mxu0 0
      %1234 = vmatmul.mubr.bf16.gmra.mxu0 %v793
      %v1235 = vpop.f32.mrf.mxu0
      %v1236 = vadd.f32 0.0, %v1235
      %v1237 = vpop.f32.mrf.mxu0
      %v1238 = vpop.f32.mrf.mxu0
      %v1239 = vadd.f32 0.0, %v1238
      %v1240 = vpop.f32.mrf.mxu0
      %1241 = vmatprep.mubr.bf16.mxu0 0
      %1242 = vmatmul.mubr.bf16.gmra.mxu0 %v796
      %v1243 = vpop.f32.mrf.mxu0
      %v1244 = vadd.f32 0.0, %v1243
      %v1245 = vpop.f32.mrf.mxu0
      %v1246 = vpop.f32.mrf.mxu0
      %v1247 = vadd.f32 0.0, %v1246
      %v1248 = vpop.f32.mrf.mxu0
      %1249 = vmatprep.mubr.bf16.mxu0 0
      %1250 = vmatmul.mubr.bf16.gmra.mxu0 %v799
      %v1251 = vpop.f32.mrf.mxu0
      %v1252 = vadd.f32 0.0, %v1251
      %v1253 = vpop.f32.mrf.mxu0
      %v1254 = vpop.f32.mrf.mxu0
      %v1255 = vadd.f32 0.0, %v1254
      %v1256 = vpop.f32.mrf.mxu0
      %1257 = vmatprep.mubr.bf16.mxu0 0
      %1258 = vmatmul.mubr.bf16.gmra.mxu0 %v802
      %v1259 = vpop.f32.mrf.mxu0
      %v1260 = vadd.f32 0.0, %v1259
      %v1261 = vpop.f32.mrf.mxu0
      %v1262 = vpop.f32.mrf.mxu0
      %v1263 = vadd.f32 0.0, %v1262
      %v1264 = vpop.f32.mrf.mxu0
      %1265 = vmatprep.mubr.bf16.mxu0 0
      %1266 = vmatmul.mubr.bf16.gmra.mxu0 %v805
      %v1267 = vpop.f32.mrf.mxu0
      %v1268 = vadd.f32 0.0, %v1267
      %v1269 = vpop.f32.mrf.mxu0
      %v1270 = vpop.f32.mrf.mxu0
      %v1271 = vadd.f32 0.0, %v1270
      %v1272 = vpop.f32.mrf.mxu0
      %1273 = vmatprep.mubr.bf16.mxu0 0
      %1274 = vmatmul.mubr.bf16.gmra.mxu0 %v808
      %v1275 = vpop.f32.mrf.mxu0
      %v1276 = vadd.f32 0.0, %v1275
      %v1277 = vpop.f32.mrf.mxu0
      %v1278 = vpop.f32.mrf.mxu0
      %v1279 = vadd.f32 0.0, %v1278
      %v1280 = vpop.f32.mrf.mxu0
      %1281 = vmatprep.mubr.bf16.mxu0 0
      %1282 = vmatmul.mubr.bf16.gmra.mxu0 %v811
      %v1283 = vpop.f32.mrf.mxu0
      %v1284 = vadd.f32 0.0, %v1283
      %v1285 = vpop.f32.mrf.mxu0
      %v1286 = vpop.f32.mrf.mxu0
      %v1287 = vadd.f32 0.0, %v1286
      %v1288 = vpop.f32.mrf.mxu0
      %1289 = vmatprep.mubr.bf16.mxu0 0
      %1290 = vmatmul.mubr.bf16.gmra.mxu0 %v814
      %v1291 = vpop.f32.mrf.mxu0
      %v1292 = vadd.f32 0.0, %v1291
      %v1293 = vpop.f32.mrf.mxu0
      %v1294 = vpop.f32.mrf.mxu0
      %v1295 = vadd.f32 0.0, %v1294
      %v1296 = vpop.f32.mrf.mxu0
      %1297 = vmatprep.mubr.bf16.mxu0 0
      %1298 = vmatmul.mubr.bf16.gmra.mxu0 %v817
      %v1299 = vpop.f32.mrf.mxu0
      %v1300 = vadd.f32 0.0, %v1299
      %v1301 = vpop.f32.mrf.mxu0
      %v1302 = vpop.f32.mrf.mxu0
      %v1303 = vadd.f32 0.0, %v1302
      %v1304 = vpop.f32.mrf.mxu0
      %1305 = vmatprep.mubr.bf16.mxu0 0
      %1306 = vmatmul.mubr.bf16.gmra.mxu0 %v820
      %v1307 = vpop.f32.mrf.mxu0
      %v1308 = vadd.f32 0.0, %v1307
      %v1309 = vpop.f32.mrf.mxu0
      %v1310 = vpop.f32.mrf.mxu0
      %v1311 = vadd.f32 0.0, %v1310
      %v1312 = vpop.f32.mrf.mxu0
      %1313 = vmatprep.mubr.bf16.mxu0 0
      %1314 = vmatmul.mubr.bf16.gmra.mxu0 %v823
      %v1315 = vpop.f32.mrf.mxu0
      %v1316 = vadd.f32 0.0, %v1315
      %v1317 = vpop.f32.mrf.mxu0
      %v1318 = vpop.f32.mrf.mxu0
      %v1319 = vadd.f32 0.0, %v1318
      %v1320 = vpop.f32.mrf.mxu0
      %1321 = vmatprep.mubr.bf16.mxu0 0
      %1322 = vmatmul.mubr.bf16.gmra.mxu0 %v826
      %v1323 = vpop.f32.mrf.mxu0
      %v1324 = vadd.f32 0.0, %v1323
      %v1325 = vpop.f32.mrf.mxu0
      %v1326 = vpop.f32.mrf.mxu0
      %v1327 = vadd.f32 0.0, %v1326
      %v1328 = vpop.f32.mrf.mxu0
      %1329 = vmatprep.mubr.bf16.mxu0 0
      %1330 = vmatmul.mubr.bf16.gmra.mxu0 %v829
      %v1331 = vpop.f32.mrf.mxu0
      %v1332 = vadd.f32 0.0, %v1331
      %v1333 = vpop.f32.mrf.mxu0
      %v1334 = vpop.f32.mrf.mxu0
      %v1335 = vadd.f32 0.0, %v1334
      %v1336 = vpop.f32.mrf.mxu0
      %1337 = vmatprep.mubr.bf16.mxu0 0
      %1338 = vmatmul.mubr.bf16.gmra.mxu0 %v832
      %v1339 = vpop.f32.mrf.mxu0
      %v1340 = vadd.f32 0.0, %v1339
      %v1341 = vpop.f32.mrf.mxu0
      %v1342 = vpop.f32.mrf.mxu0
      %v1343 = vadd.f32 0.0, %v1342
      %v1344 = vpop.f32.mrf.mxu0
      %1345 = vmatprep.mubr.bf16.mxu0 0
      %1346 = vmatmul.mubr.bf16.gmra.mxu0 %v835
      %v1347 = vpop.f32.mrf.mxu0
      %v1348 = vadd.f32 0.0, %v1347
      %v1349 = vpop.f32.mrf.mxu0
      %v1350 = vpop.f32.mrf.mxu0
      %v1351 = vadd.f32 0.0, %v1350
      %v1352 = vpop.f32.mrf.mxu0
      %1353 = vmatprep.mubr.bf16.mxu0 0
      %1354 = vmatmul.mubr.bf16.gmra.mxu0 %v838
      %v1355 = vpop.f32.mrf.mxu0
      %v1356 = vadd.f32 0.0, %v1355
      %v1357 = vpop.f32.mrf.mxu0
      %v1358 = vpop.f32.mrf.mxu0
      %v1359 = vadd.f32 0.0, %v1358
      %v1360 = vpop.f32.mrf.mxu0
      %1361 = vmatprep.mubr.bf16.mxu0 0
      %1362 = vmatmul.mubr.bf16.gmra.mxu0 %v841
      %v1363 = vpop.f32.mrf.mxu0
      %v1364 = vadd.f32 0.0, %v1363
      %v1365 = vpop.f32.mrf.mxu0
      %v1366 = vpop.f32.mrf.mxu0
      %v1367 = vadd.f32 0.0, %v1366
      %v1368 = vpop.f32.mrf.mxu0
      %1369 = vmatprep.mubr.bf16.mxu0 0
      %1370 = vmatmul.mubr.bf16.gmra.mxu0 %v844
      %v1371 = vpop.f32.mrf.mxu0
      %v1372 = vadd.f32 0.0, %v1371
      %v1373 = vpop.f32.mrf.mxu0
      %v1374 = vpop.f32.mrf.mxu0
      %v1375 = vadd.f32 0.0, %v1374
      %v1376 = vpop.f32.mrf.mxu0
      %1377 = vmatprep.mubr.bf16.mxu0 0
      %1378 = vmatmul.mubr.bf16.gmra.mxu0 %v847
      %v1379 = vpop.f32.mrf.mxu0
      %v1380 = vadd.f32 0.0, %v1379
      %v1381 = vpop.f32.mrf.mxu0
      %v1382 = vpop.f32.mrf.mxu0
      %v1383 = vadd.f32 0.0, %v1382
      %v1384 = vpop.f32.mrf.mxu0
      %1385 = vmatprep.mubr.bf16.mxu0 0
      %1386 = vmatmul.mubr.bf16.gmra.mxu0 %v850
      %v1387 = vpop.f32.mrf.mxu0
      %v1388 = vadd.f32 0.0, %v1387
      %v1389 = vpop.f32.mrf.mxu0
      %v1390 = vpop.f32.mrf.mxu0
      %v1391 = vadd.f32 0.0, %v1390
      %v1392 = vpop.f32.mrf.mxu0
      %1393 = vmatprep.mubr.bf16.mxu0 0
      %1394 = vmatmul.mubr.bf16.gmra.mxu0 %v853
      %v1395 = vpop.f32.mrf.mxu0
      %v1396 = vadd.f32 0.0, %v1395
      %v1397 = vpop.f32.mrf.mxu0
      %v1398 = vpop.f32.mrf.mxu0
      %v1399 = vadd.f32 0.0, %v1398
      %v1400 = vpop.f32.mrf.mxu0
      %1401 = vmatprep.mubr.bf16.mxu0 0
      %1402 = vmatmul.mubr.bf16.gmra.mxu0 %v856
      %v1403 = vpop.f32.mrf.mxu0
      %v1404 = vadd.f32 0.0, %v1403
      %v1405 = vpop.f32.mrf.mxu0
      %v1406 = vpop.f32.mrf.mxu0
      %v1407 = vadd.f32 0.0, %v1406
      %v1408 = vpop.f32.mrf.mxu0
      %1409 = vdwg.mxu0
      %v1410 = vld [vmem:[%s2] sm:$0x1]
      %v1412 = vlaneseq
      %v1413 = vshrl.u32 %v1412, 7
      %v1414 = vsub.s32 0, %v1413
      %v1415 = vrot.slane %v1410, %v1414
      %v1417 = vmul.f32 %v900, %v1415
      %v1418 = vmul.f32 %v903, %v1415
      %v1419 = vmul.f32 %v908, %v1415
      %v1420 = vmul.f32 %v911, %v1415
      %v1421 = vmul.f32 %v916, %v1415
      %v1422 = vmul.f32 %v919, %v1415
      %v1423 = vmul.f32 %v924, %v1415
      %v1424 = vmul.f32 %v927, %v1415
      %v1425 = vmul.f32 %v932, %v1415
      %v1426 = vmul.f32 %v935, %v1415
      %v1427 = vmul.f32 %v940, %v1415
      %v1428 = vmul.f32 %v943, %v1415
      %v1429 = vmul.f32 %v948, %v1415
      %v1430 = vmul.f32 %v951, %v1415
      %v1431 = vmul.f32 %v956, %v1415
      %v1432 = vmul.f32 %v959, %v1415
      %v1433 = vmul.f32 %v964, %v1415
      %v1434 = vmul.f32 %v967, %v1415
      %v1435 = vmul.f32 %v972, %v1415
      %v1436 = vmul.f32 %v975, %v1415
      %v1437 = vmul.f32 %v980, %v1415
      %v1438 = vmul.f32 %v983, %v1415
      %v1439 = vmul.f32 %v988, %v1415
      %v1440 = vmul.f32 %v991, %v1415
      %v1441 = vmul.f32 %v996, %v1415
      %v1442 = vmul.f32 %v999, %v1415
      %v1443 = vmul.f32 %v1004, %v1415
      %v1444 = vmul.f32 %v1007, %v1415
      %v1445 = vmul.f32 %v1012, %v1415
      %v1446 = vmul.f32 %v1015, %v1415
      %v1447 = vmul.f32 %v1020, %v1415
      %v1448 = vmul.f32 %v1023, %v1415
      %v1449 = vmul.f32 %v1028, %v1415
      %v1450 = vmul.f32 %v1031, %v1415
      %v1451 = vmul.f32 %v1036, %v1415
      %v1452 = vmul.f32 %v1039, %v1415
      %v1453 = vmul.f32 %v1044, %v1415
      %v1454 = vmul.f32 %v1047, %v1415
      %v1455 = vmul.f32 %v1052, %v1415
      %v1456 = vmul.f32 %v1055, %v1415
      %v1457 = vmul.f32 %v1060, %v1415
      %v1458 = vmul.f32 %v1063, %v1415
      %v1459 = vmul.f32 %v1068, %v1415
      %v1460 = vmul.f32 %v1071, %v1415
      %v1461 = vmul.f32 %v1076, %v1415
      %v1462 = vmul.f32 %v1079, %v1415
      %v1463 = vmul.f32 %v1084, %v1415
      %v1464 = vmul.f32 %v1087, %v1415
      %v1465 = vmul.f32 %v1092, %v1415
      %v1466 = vmul.f32 %v1095, %v1415
      %v1467 = vmul.f32 %v1100, %v1415
      %v1468 = vmul.f32 %v1103, %v1415
      %v1469 = vmul.f32 %v1108, %v1415
      %v1470 = vmul.f32 %v1111, %v1415
      %v1471 = vmul.f32 %v1116, %v1415
      %v1472 = vmul.f32 %v1119, %v1415
      %v1473 = vmul.f32 %v1124, %v1415
      %v1474 = vmul.f32 %v1127, %v1415
      %v1475 = vmul.f32 %v1132, %v1415
      %v1476 = vmul.f32 %v1135, %v1415
      %v1477 = vmul.f32 %v1140, %v1415
      %v1478 = vmul.f32 %v1143, %v1415
      %v1479 = vmul.f32 %v1148, %v1415
      %v1480 = vmul.f32 %v1151, %v1415
      %v1481 = vmul.f32 %v1156, %v1415
      %v1482 = vmul.f32 %v1159, %v1415
      %v1483 = vmul.f32 %v1164, %v1415
      %v1484 = vmul.f32 %v1167, %v1415
      %v1485 = vmul.f32 %v1172, %v1415
      %v1486 = vmul.f32 %v1175, %v1415
      %v1487 = vmul.f32 %v1180, %v1415
      %v1488 = vmul.f32 %v1183, %v1415
      %v1489 = vmul.f32 %v1188, %v1415
      %v1490 = vmul.f32 %v1191, %v1415
      %v1491 = vmul.f32 %v1196, %v1415
      %v1492 = vmul.f32 %v1199, %v1415
      %v1493 = vmul.f32 %v1204, %v1415
      %v1494 = vmul.f32 %v1207, %v1415
      %v1495 = vmul.f32 %v1212, %v1415
      %v1496 = vmul.f32 %v1215, %v1415
      %v1497 = vmul.f32 %v1220, %v1415
      %v1498 = vmul.f32 %v1223, %v1415
      %v1499 = vmul.f32 %v1228, %v1415
      %v1500 = vmul.f32 %v1231, %v1415
      %v1501 = vmul.f32 %v1236, %v1415
      %v1502 = vmul.f32 %v1239, %v1415
      %v1503 = vmul.f32 %v1244, %v1415
      %v1504 = vmul.f32 %v1247, %v1415
      %v1505 = vmul.f32 %v1252, %v1415
      %v1506 = vmul.f32 %v1255, %v1415
      %v1507 = vmul.f32 %v1260, %v1415
      %v1508 = vmul.f32 %v1263, %v1415
      %v1509 = vmul.f32 %v1268, %v1415
      %v1510 = vmul.f32 %v1271, %v1415
      %v1511 = vmul.f32 %v1276, %v1415
      %v1512 = vmul.f32 %v1279, %v1415
      %v1513 = vmul.f32 %v1284, %v1415
      %v1514 = vmul.f32 %v1287, %v1415
      %v1515 = vmul.f32 %v1292, %v1415
      %v1516 = vmul.f32 %v1295, %v1415
      %v1517 = vmul.f32 %v1300, %v1415
      %v1518 = vmul.f32 %v1303, %v1415
      %v1519 = vmul.f32 %v1308, %v1415
      %v1520 = vmul.f32 %v1311, %v1415
      %v1521 = vmul.f32 %v1316, %v1415
      %v1522 = vmul.f32 %v1319, %v1415
      %v1523 = vmul.f32 %v1324, %v1415
      %v1524 = vmul.f32 %v1327, %v1415
      %v1525 = vmul.f32 %v1332, %v1415
      %v1526 = vmul.f32 %v1335, %v1415
      %v1527 = vmul.f32 %v1340, %v1415
      %v1528 = vmul.f32 %v1343, %v1415
      %v1529 = vmul.f32 %v1348, %v1415
      %v1530 = vmul.f32 %v1351, %v1415
      %v1531 = vmul.f32 %v1356, %v1415
      %v1532 = vmul.f32 %v1359, %v1415
      %v1533 = vmul.f32 %v1364, %v1415
      %v1534 = vmul.f32 %v1367, %v1415
      %v1535 = vmul.f32 %v1372, %v1415
      %v1536 = vmul.f32 %v1375, %v1415
      %v1537 = vmul.f32 %v1380, %v1415
      %v1538 = vmul.f32 %v1383, %v1415
      %v1539 = vmul.f32 %v1388, %v1415
      %v1540 = vmul.f32 %v1391, %v1415
      %v1541 = vmul.f32 %v1396, %v1415
      %v1542 = vmul.f32 %v1399, %v1415
      %v1543 = vmul.f32 %v1404, %v1415
      %v1544 = vmul.f32 %v1407, %v1415
      %v1545 = vld [vmem:[%s3] sm:$0x1]
      %v1547 = vlaneseq
      %v1548 = vshrl.u32 %v1547, 7
      %v1549 = vsub.s32 0, %v1548
      %v1550 = vrot.slane %v1545, %v1549
      %v1552 = vadd.f32 %v1417, %v1550
      %v1553 = vadd.f32 %v1418, %v1550
      %v1554 = vadd.f32 %v1419, %v1550
      %v1555 = vadd.f32 %v1420, %v1550
      %v1556 = vadd.f32 %v1421, %v1550
      %v1557 = vadd.f32 %v1422, %v1550
      %v1558 = vadd.f32 %v1423, %v1550
      %v1559 = vadd.f32 %v1424, %v1550
      %v1560 = vadd.f32 %v1425, %v1550
      %v1561 = vadd.f32 %v1426, %v1550
      %v1562 = vadd.f32 %v1427, %v1550
      %v1563 = vadd.f32 %v1428, %v1550
      %v1564 = vadd.f32 %v1429, %v1550
      %v1565 = vadd.f32 %v1430, %v1550
      %v1566 = vadd.f32 %v1431, %v1550
      %v1567 = vadd.f32 %v1432, %v1550
      %v1568 = vadd.f32 %v1433, %v1550
      %v1569 = vadd.f32 %v1434, %v1550
      %v1570 = vadd.f32 %v1435, %v1550
      %v1571 = vadd.f32 %v1436, %v1550
      %v1572 = vadd.f32 %v1437, %v1550
      %v1573 = vadd.f32 %v1438, %v1550
      %v1574 = vadd.f32 %v1439, %v1550
      %v1575 = vadd.f32 %v1440, %v1550
      %v1576 = vadd.f32 %v1441, %v1550
      %v1577 = vadd.f32 %v1442, %v1550
      %v1578 = vadd.f32 %v1443, %v1550
      %v1579 = vadd.f32 %v1444, %v1550
      %v1580 = vadd.f32 %v1445, %v1550
      %v1581 = vadd.f32 %v1446, %v1550
      %v1582 = vadd.f32 %v1447, %v1550
      %v1583 = vadd.f32 %v1448, %v1550
      %v1584 = vadd.f32 %v1449, %v1550
      %v1585 = vadd.f32 %v1450, %v1550
      %v1586 = vadd.f32 %v1451, %v1550
      %v1587 = vadd.f32 %v1452, %v1550
      %v1588 = vadd.f32 %v1453, %v1550
      %v1589 = vadd.f32 %v1454, %v1550
      %v1590 = vadd.f32 %v1455, %v1550
      %v1591 = vadd.f32 %v1456, %v1550
      %v1592 = vadd.f32 %v1457, %v1550
      %v1593 = vadd.f32 %v1458, %v1550
      %v1594 = vadd.f32 %v1459, %v1550
      %v1595 = vadd.f32 %v1460, %v1550
      %v1596 = vadd.f32 %v1461, %v1550
      %v1597 = vadd.f32 %v1462, %v1550
      %v1598 = vadd.f32 %v1463, %v1550
      %v1599 = vadd.f32 %v1464, %v1550
      %v1600 = vadd.f32 %v1465, %v1550
      %v1601 = vadd.f32 %v1466, %v1550
      %v1602 = vadd.f32 %v1467, %v1550
      %v1603 = vadd.f32 %v1468, %v1550
      %v1604 = vadd.f32 %v1469, %v1550
      %v1605 = vadd.f32 %v1470, %v1550
      %v1606 = vadd.f32 %v1471, %v1550
      %v1607 = vadd.f32 %v1472, %v1550
      %v1608 = vadd.f32 %v1473, %v1550
      %v1609 = vadd.f32 %v1474, %v1550
      %v1610 = vadd.f32 %v1475, %v1550
      %v1611 = vadd.f32 %v1476, %v1550
      %v1612 = vadd.f32 %v1477, %v1550
      %v1613 = vadd.f32 %v1478, %v1550
      %v1614 = vadd.f32 %v1479, %v1550
      %v1615 = vadd.f32 %v1480, %v1550
      %v1616 = vadd.f32 %v1481, %v1550
      %v1617 = vadd.f32 %v1482, %v1550
      %v1618 = vadd.f32 %v1483, %v1550
      %v1619 = vadd.f32 %v1484, %v1550
      %v1620 = vadd.f32 %v1485, %v1550
      %v1621 = vadd.f32 %v1486, %v1550
      %v1622 = vadd.f32 %v1487, %v1550
      %v1623 = vadd.f32 %v1488, %v1550
      %v1624 = vadd.f32 %v1489, %v1550
      %v1625 = vadd.f32 %v1490, %v1550
      %v1626 = vadd.f32 %v1491, %v1550
      %v1627 = vadd.f32 %v1492, %v1550
      %v1628 = vadd.f32 %v1493, %v1550
      %v1629 = vadd.f32 %v1494, %v1550
      %v1630 = vadd.f32 %v1495, %v1550
      %v1631 = vadd.f32 %v1496, %v1550
      %v1632 = vadd.f32 %v1497, %v1550
      %v1633 = vadd.f32 %v1498, %v1550
      %v1634 = vadd.f32 %v1499, %v1550
      %v1635 = vadd.f32 %v1500, %v1550
      %v1636 = vadd.f32 %v1501, %v1550
      %v1637 = vadd.f32 %v1502, %v1550
      %v1638 = vadd.f32 %v1503, %v1550
      %v1639 = vadd.f32 %v1504, %v1550
      %v1640 = vadd.f32 %v1505, %v1550
      %v1641 = vadd.f32 %v1506, %v1550
      %v1642 = vadd.f32 %v1507, %v1550
      %v1643 = vadd.f32 %v1508, %v1550
      %v1644 = vadd.f32 %v1509, %v1550
      %v1645 = vadd.f32 %v1510, %v1550
      %v1646 = vadd.f32 %v1511, %v1550
      %v1647 = vadd.f32 %v1512, %v1550
      %v1648 = vadd.f32 %v1513, %v1550
      %v1649 = vadd.f32 %v1514, %v1550
      %v1650 = vadd.f32 %v1515, %v1550
      %v1651 = vadd.f32 %v1516, %v1550
      %v1652 = vadd.f32 %v1517, %v1550
      %v1653 = vadd.f32 %v1518, %v1550
      %v1654 = vadd.f32 %v1519, %v1550
      %v1655 = vadd.f32 %v1520, %v1550
      %v1656 = vadd.f32 %v1521, %v1550
      %v1657 = vadd.f32 %v1522, %v1550
      %v1658 = vadd.f32 %v1523, %v1550
      %v1659 = vadd.f32 %v1524, %v1550
      %v1660 = vadd.f32 %v1525, %v1550
      %v1661 = vadd.f32 %v1526, %v1550
      %v1662 = vadd.f32 %v1527, %v1550
      %v1663 = vadd.f32 %v1528, %v1550
      %v1664 = vadd.f32 %v1529, %v1550
      %v1665 = vadd.f32 %v1530, %v1550
      %v1666 = vadd.f32 %v1531, %v1550
      %v1667 = vadd.f32 %v1532, %v1550
      %v1668 = vadd.f32 %v1533, %v1550
      %v1669 = vadd.f32 %v1534, %v1550
      %v1670 = vadd.f32 %v1535, %v1550
      %v1671 = vadd.f32 %v1536, %v1550
      %v1672 = vadd.f32 %v1537, %v1550
      %v1673 = vadd.f32 %v1538, %v1550
      %v1674 = vadd.f32 %v1539, %v1550
      %v1675 = vadd.f32 %v1540, %v1550
      %v1676 = vadd.f32 %v1541, %v1550
      %v1677 = vadd.f32 %v1542, %v1550
      %v1678 = vadd.f32 %v1543, %v1550
      %v1679 = vadd.f32 %v1544, %v1550
      %v1680 = vpack.c.bf16 %v1553, %v1552
      %v1681 = vpack.c.bf16 %v1555, %v1554
      %v1682 = vpack.c.bf16 %v1557, %v1556
      %v1683 = vpack.c.bf16 %v1559, %v1558
      %v1684 = vpack.c.bf16 %v1561, %v1560
      %v1685 = vpack.c.bf16 %v1563, %v1562
      %v1686 = vpack.c.bf16 %v1565, %v1564
      %v1687 = vpack.c.bf16 %v1567, %v1566
      %v1688 = vpack.c.bf16 %v1569, %v1568
      %v1689 = vpack.c.bf16 %v1571, %v1570
      %v1690 = vpack.c.bf16 %v1573, %v1572
      %v1691 = vpack.c.bf16 %v1575, %v1574
      %v1692 = vpack.c.bf16 %v1577, %v1576
      %v1693 = vpack.c.bf16 %v1579, %v1578
      %v1694 = vpack.c.bf16 %v1581, %v1580
      %v1695 = vpack.c.bf16 %v1583, %v1582
      %v1696 = vpack.c.bf16 %v1585, %v1584
      %v1697 = vpack.c.bf16 %v1587, %v1586
      %v1698 = vpack.c.bf16 %v1589, %v1588
      %v1699 = vpack.c.bf16 %v1591, %v1590
      %v1700 = vpack.c.bf16 %v1593, %v1592
      %v1701 = vpack.c.bf16 %v1595, %v1594
      %v1702 = vpack.c.bf16 %v1597, %v1596
      %v1703 = vpack.c.bf16 %v1599, %v1598
      %v1704 = vpack.c.bf16 %v1601, %v1600
      %v1705 = vpack.c.bf16 %v1603, %v1602
      %v1706 = vpack.c.bf16 %v1605, %v1604
      %v1707 = vpack.c.bf16 %v1607, %v1606
      %v1708 = vpack.c.bf16 %v1609, %v1608
      %v1709 = vpack.c.bf16 %v1611, %v1610
      %v1710 = vpack.c.bf16 %v1613, %v1612
      %v1711 = vpack.c.bf16 %v1615, %v1614
      %v1712 = vpack.c.bf16 %v1617, %v1616
      %v1713 = vpack.c.bf16 %v1619, %v1618
      %v1714 = vpack.c.bf16 %v1621, %v1620
      %v1715 = vpack.c.bf16 %v1623, %v1622
      %v1716 = vpack.c.bf16 %v1625, %v1624
      %v1717 = vpack.c.bf16 %v1627, %v1626
      %v1718 = vpack.c.bf16 %v1629, %v1628
      %v1719 = vpack.c.bf16 %v1631, %v1630
      %v1720 = vpack.c.bf16 %v1633, %v1632
      %v1721 = vpack.c.bf16 %v1635, %v1634
      %v1722 = vpack.c.bf16 %v1637, %v1636
      %v1723 = vpack.c.bf16 %v1639, %v1638
      %v1724 = vpack.c.bf16 %v1641, %v1640
      %v1725 = vpack.c.bf16 %v1643, %v1642
      %v1726 = vpack.c.bf16 %v1645, %v1644
      %v1727 = vpack.c.bf16 %v1647, %v1646
      %v1728 = vpack.c.bf16 %v1649, %v1648
      %v1729 = vpack.c.bf16 %v1651, %v1650
      %v1730 = vpack.c.bf16 %v1653, %v1652
      %v1731 = vpack.c.bf16 %v1655, %v1654
      %v1732 = vpack.c.bf16 %v1657, %v1656
      %v1733 = vpack.c.bf16 %v1659, %v1658
      %v1734 = vpack.c.bf16 %v1661, %v1660
      %v1735 = vpack.c.bf16 %v1663, %v1662
      %v1736 = vpack.c.bf16 %v1665, %v1664
      %v1737 = vpack.c.bf16 %v1667, %v1666
      %v1738 = vpack.c.bf16 %v1669, %v1668
      %v1739 = vpack.c.bf16 %v1671, %v1670
      %v1740 = vpack.c.bf16 %v1673, %v1672
      %v1741 = vpack.c.bf16 %v1675, %v1674
      %v1742 = vpack.c.bf16 %v1677, %v1676
      %v1743 = vpack.c.bf16 %v1679, %v1678
      %v1808 = vunpack.c.l.b16 %v1680
      %v1809 = vunpack.c.h.b16 %v1680
      %v1810 = vunpack.c.l.b16 %v1681
      %v1811 = vunpack.c.h.b16 %v1681
      %v1812 = vunpack.c.l.b16 %v1682
      %v1813 = vunpack.c.h.b16 %v1682
      %v1814 = vunpack.c.l.b16 %v1683
      %v1815 = vunpack.c.h.b16 %v1683
      %v1816 = vunpack.c.l.b16 %v1684
      %v1817 = vunpack.c.h.b16 %v1684
      %v1818 = vunpack.c.l.b16 %v1685
      %v1819 = vunpack.c.h.b16 %v1685
      %v1820 = vunpack.c.l.b16 %v1686
      %v1821 = vunpack.c.h.b16 %v1686
      %v1822 = vunpack.c.l.b16 %v1687
      %v1823 = vunpack.c.h.b16 %v1687
      %v1824 = vunpack.c.l.b16 %v1688
      %v1825 = vunpack.c.h.b16 %v1688
      %v1826 = vunpack.c.l.b16 %v1689
      %v1827 = vunpack.c.h.b16 %v1689
      %v1828 = vunpack.c.l.b16 %v1690
      %v1829 = vunpack.c.h.b16 %v1690
      %v1830 = vunpack.c.l.b16 %v1691
      %v1831 = vunpack.c.h.b16 %v1691
      %v1832 = vunpack.c.l.b16 %v1692
      %v1833 = vunpack.c.h.b16 %v1692
      %v1834 = vunpack.c.l.b16 %v1693
      %v1835 = vunpack.c.h.b16 %v1693
      %v1836 = vunpack.c.l.b16 %v1694
      %v1837 = vunpack.c.h.b16 %v1694
      %v1838 = vunpack.c.l.b16 %v1695
      %v1839 = vunpack.c.h.b16 %v1695
      %v1840 = vunpack.c.l.b16 %v1696
      %v1841 = vunpack.c.h.b16 %v1696
      %v1842 = vunpack.c.l.b16 %v1697
      %v1843 = vunpack.c.h.b16 %v1697
      %v1844 = vunpack.c.l.b16 %v1698
      %v1845 = vunpack.c.h.b16 %v1698
      %v1846 = vunpack.c.l.b16 %v1699
      %v1847 = vunpack.c.h.b16 %v1699
      %v1848 = vunpack.c.l.b16 %v1700
      %v1849 = vunpack.c.h.b16 %v1700
      %v1850 = vunpack.c.l.b16 %v1701
      %v1851 = vunpack.c.h.b16 %v1701
      %v1852 = vunpack.c.l.b16 %v1702
      %v1853 = vunpack.c.h.b16 %v1702
      %v1854 = vunpack.c.l.b16 %v1703
      %v1855 = vunpack.c.h.b16 %v1703
      %v1856 = vunpack.c.l.b16 %v1704
      %v1857 = vunpack.c.h.b16 %v1704
      %v1858 = vunpack.c.l.b16 %v1705
      %v1859 = vunpack.c.h.b16 %v1705
      %v1860 = vunpack.c.l.b16 %v1706
      %v1861 = vunpack.c.h.b16 %v1706
      %v1862 = vunpack.c.l.b16 %v1707
      %v1863 = vunpack.c.h.b16 %v1707
      %v1864 = vunpack.c.l.b16 %v1708
      %v1865 = vunpack.c.h.b16 %v1708
      %v1866 = vunpack.c.l.b16 %v1709
      %v1867 = vunpack.c.h.b16 %v1709
      %v1868 = vunpack.c.l.b16 %v1710
      %v1869 = vunpack.c.h.b16 %v1710
      %v1870 = vunpack.c.l.b16 %v1711
      %v1871 = vunpack.c.h.b16 %v1711
      %v1872 = vunpack.c.l.b16 %v1712
      %v1873 = vunpack.c.h.b16 %v1712
      %v1874 = vunpack.c.l.b16 %v1713
      %v1875 = vunpack.c.h.b16 %v1713
      %v1876 = vunpack.c.l.b16 %v1714
      %v1877 = vunpack.c.h.b16 %v1714
      %v1878 = vunpack.c.l.b16 %v1715
      %v1879 = vunpack.c.h.b16 %v1715
      %v1880 = vunpack.c.l.b16 %v1716
      %v1881 = vunpack.c.h.b16 %v1716
      %v1882 = vunpack.c.l.b16 %v1717
      %v1883 = vunpack.c.h.b16 %v1717
      %v1884 = vunpack.c.l.b16 %v1718
      %v1885 = vunpack.c.h.b16 %v1718
      %v1886 = vunpack.c.l.b16 %v1719
      %v1887 = vunpack.c.h.b16 %v1719
      %v1888 = vunpack.c.l.b16 %v1720
      %v1889 = vunpack.c.h.b16 %v1720
      %v1890 = vunpack.c.l.b16 %v1721
      %v1891 = vunpack.c.h.b16 %v1721
      %v1892 = vunpack.c.l.b16 %v1722
      %v1893 = vunpack.c.h.b16 %v1722
      %v1894 = vunpack.c.l.b16 %v1723
      %v1895 = vunpack.c.h.b16 %v1723
      %v1896 = vunpack.c.l.b16 %v1724
      %v1897 = vunpack.c.h.b16 %v1724
      %v1898 = vunpack.c.l.b16 %v1725
      %v1899 = vunpack.c.h.b16 %v1725
      %v1900 = vunpack.c.l.b16 %v1726
      %v1901 = vunpack.c.h.b16 %v1726
      %v1902 = vunpack.c.l.b16 %v1727
      %v1903 = vunpack.c.h.b16 %v1727
      %v1904 = vunpack.c.l.b16 %v1728
      %v1905 = vunpack.c.h.b16 %v1728
      %v1906 = vunpack.c.l.b16 %v1729
      %v1907 = vunpack.c.h.b16 %v1729
      %v1908 = vunpack.c.l.b16 %v1730
      %v1909 = vunpack.c.h.b16 %v1730
      %v1910 = vunpack.c.l.b16 %v1731
      %v1911 = vunpack.c.h.b16 %v1731
      %v1912 = vunpack.c.l.b16 %v1732
      %v1913 = vunpack.c.h.b16 %v1732
      %v1914 = vunpack.c.l.b16 %v1733
      %v1915 = vunpack.c.h.b16 %v1733
      %v1916 = vunpack.c.l.b16 %v1734
      %v1917 = vunpack.c.h.b16 %v1734
      %v1918 = vunpack.c.l.b16 %v1735
      %v1919 = vunpack.c.h.b16 %v1735
      %v1920 = vunpack.c.l.b16 %v1736
      %v1921 = vunpack.c.h.b16 %v1736
      %v1922 = vunpack.c.l.b16 %v1737
      %v1923 = vunpack.c.h.b16 %v1737
      %v1924 = vunpack.c.l.b16 %v1738
      %v1925 = vunpack.c.h.b16 %v1738
      %v1926 = vunpack.c.l.b16 %v1739
      %v1927 = vunpack.c.h.b16 %v1739
      %v1928 = vunpack.c.l.b16 %v1740
      %v1929 = vunpack.c.h.b16 %v1740
      %v1930 = vunpack.c.l.b16 %v1741
      %v1931 = vunpack.c.h.b16 %v1741
      %v1932 = vunpack.c.l.b16 %v1742
      %v1933 = vunpack.c.h.b16 %v1742
      %v1934 = vunpack.c.l.b16 %v1743
      %v1935 = vunpack.c.h.b16 %v1743
      %v1936 = vpack.c.b16 %v1808, %v1808
      %v1937 = vpack.c.b16 %v1809, %v1809
      %v1938 = vpack.c.b16 %v1810, %v1810
      %v1939 = vpack.c.b16 %v1811, %v1811
      %v1940 = vpack.c.b16 %v1812, %v1812
      %v1941 = vpack.c.b16 %v1813, %v1813
      %v1942 = vpack.c.b16 %v1814, %v1814
      %v1943 = vpack.c.b16 %v1815, %v1815
      %v1944 = vpack.c.b16 %v1816, %v1816
      %v1945 = vpack.c.b16 %v1817, %v1817
      %v1946 = vpack.c.b16 %v1818, %v1818
      %v1947 = vpack.c.b16 %v1819, %v1819
      %v1948 = vpack.c.b16 %v1820, %v1820
      %v1949 = vpack.c.b16 %v1821, %v1821
      %v1950 = vpack.c.b16 %v1822, %v1822
      %v1951 = vpack.c.b16 %v1823, %v1823
      %v1952 = vpack.c.b16 %v1824, %v1824
      %v1953 = vpack.c.b16 %v1825, %v1825
      %v1954 = vpack.c.b16 %v1826, %v1826
      %v1955 = vpack.c.b16 %v1827, %v1827
      %v1956 = vpack.c.b16 %v1828, %v1828
      %v1957 = vpack.c.b16 %v1829, %v1829
      %v1958 = vpack.c.b16 %v1830, %v1830
      %v1959 = vpack.c.b16 %v1831, %v1831
      %v1960 = vpack.c.b16 %v1832, %v1832
      %v1961 = vpack.c.b16 %v1833, %v1833
      %v1962 = vpack.c.b16 %v1834, %v1834
      %v1963 = vpack.c.b16 %v1835, %v1835
      %v1964 = vpack.c.b16 %v1836, %v1836
      %v1965 = vpack.c.b16 %v1837, %v1837
      %v1966 = vpack.c.b16 %v1838, %v1838
      %v1967 = vpack.c.b16 %v1839, %v1839
      %v1968 = vpack.c.b16 %v1840, %v1840
      %v1969 = vpack.c.b16 %v1841, %v1841
      %v1970 = vpack.c.b16 %v1842, %v1842
      %v1971 = vpack.c.b16 %v1843, %v1843
      %v1972 = vpack.c.b16 %v1844, %v1844
      %v1973 = vpack.c.b16 %v1845, %v1845
      %v1974 = vpack.c.b16 %v1846, %v1846
      %v1975 = vpack.c.b16 %v1847, %v1847
      %v1976 = vpack.c.b16 %v1848, %v1848
      %v1977 = vpack.c.b16 %v1849, %v1849
      %v1978 = vpack.c.b16 %v1850, %v1850
      %v1979 = vpack.c.b16 %v1851, %v1851
      %v1980 = vpack.c.b16 %v1852, %v1852
      %v1981 = vpack.c.b16 %v1853, %v1853
      %v1982 = vpack.c.b16 %v1854, %v1854
      %v1983 = vpack.c.b16 %v1855, %v1855
      %v1984 = vpack.c.b16 %v1856, %v1856
      %v1985 = vpack.c.b16 %v1857, %v1857
      %v1986 = vpack.c.b16 %v1858, %v1858
      %v1987 = vpack.c.b16 %v1859, %v1859
      %v1988 = vpack.c.b16 %v1860, %v1860
      %v1989 = vpack.c.b16 %v1861, %v1861
      %v1990 = vpack.c.b16 %v1862, %v1862
      %v1991 = vpack.c.b16 %v1863, %v1863
      %v1992 = vpack.c.b16 %v1864, %v1864
      %v1993 = vpack.c.b16 %v1865, %v1865
      %v1994 = vpack.c.b16 %v1866, %v1866
      %v1995 = vpack.c.b16 %v1867, %v1867
      %v1996 = vpack.c.b16 %v1868, %v1868
      %v1997 = vpack.c.b16 %v1869, %v1869
      %v1998 = vpack.c.b16 %v1870, %v1870
      %v1999 = vpack.c.b16 %v1871, %v1871
      %v2000 = vpack.c.b16 %v1872, %v1872
      %v2001 = vpack.c.b16 %v1873, %v1873
      %v2002 = vpack.c.b16 %v1874, %v1874
      %v2003 = vpack.c.b16 %v1875, %v1875
      %v2004 = vpack.c.b16 %v1876, %v1876
      %v2005 = vpack.c.b16 %v1877, %v1877
      %v2006 = vpack.c.b16 %v1878, %v1878
      %v2007 = vpack.c.b16 %v1879, %v1879
      %v2008 = vpack.c.b16 %v1880, %v1880
      %v2009 = vpack.c.b16 %v1881, %v1881
      %v2010 = vpack.c.b16 %v1882, %v1882
      %v2011 = vpack.c.b16 %v1883, %v1883
      %v2012 = vpack.c.b16 %v1884, %v1884
      %v2013 = vpack.c.b16 %v1885, %v1885
      %v2014 = vpack.c.b16 %v1886, %v1886
      %v2015 = vpack.c.b16 %v1887, %v1887
      %v2016 = vpack.c.b16 %v1888, %v1888
      %v2017 = vpack.c.b16 %v1889, %v1889
      %v2018 = vpack.c.b16 %v1890, %v1890
      %v2019 = vpack.c.b16 %v1891, %v1891
      %v2020 = vpack.c.b16 %v1892, %v1892
      %v2021 = vpack.c.b16 %v1893, %v1893
      %v2022 = vpack.c.b16 %v1894, %v1894
      %v2023 = vpack.c.b16 %v1895, %v1895
      %v2024 = vpack.c.b16 %v1896, %v1896
      %v2025 = vpack.c.b16 %v1897, %v1897
      %v2026 = vpack.c.b16 %v1898, %v1898
      %v2027 = vpack.c.b16 %v1899, %v1899
      %v2028 = vpack.c.b16 %v1900, %v1900
      %v2029 = vpack.c.b16 %v1901, %v1901
      %v2030 = vpack.c.b16 %v1902, %v1902
      %v2031 = vpack.c.b16 %v1903, %v1903
      %v2032 = vpack.c.b16 %v1904, %v1904
      %v2033 = vpack.c.b16 %v1905, %v1905
      %v2034 = vpack.c.b16 %v1906, %v1906
      %v2035 = vpack.c.b16 %v1907, %v1907
      %v2036 = vpack.c.b16 %v1908, %v1908
      %v2037 = vpack.c.b16 %v1909, %v1909
      %v2038 = vpack.c.b16 %v1910, %v1910
      %v2039 = vpack.c.b16 %v1911, %v1911
      %v2040 = vpack.c.b16 %v1912, %v1912
      %v2041 = vpack.c.b16 %v1913, %v1913
      %v2042 = vpack.c.b16 %v1914, %v1914
      %v2043 = vpack.c.b16 %v1915, %v1915
      %v2044 = vpack.c.b16 %v1916, %v1916
      %v2045 = vpack.c.b16 %v1917, %v1917
      %v2046 = vpack.c.b16 %v1918, %v1918
      %v2047 = vpack.c.b16 %v1919, %v1919
      %v2048 = vpack.c.b16 %v1920, %v1920
      %v2049 = vpack.c.b16 %v1921, %v1921
      %v2050 = vpack.c.b16 %v1922, %v1922
      %v2051 = vpack.c.b16 %v1923, %v1923
      %v2052 = vpack.c.b16 %v1924, %v1924
      %v2053 = vpack.c.b16 %v1925, %v1925
      %v2054 = vpack.c.b16 %v1926, %v1926
      %v2055 = vpack.c.b16 %v1927, %v1927
      %v2056 = vpack.c.b16 %v1928, %v1928
      %v2057 = vpack.c.b16 %v1929, %v1929
      %v2058 = vpack.c.b16 %v1930, %v1930
      %v2059 = vpack.c.b16 %v1931, %v1931
      %v2060 = vpack.c.b16 %v1932, %v1932
      %v2061 = vpack.c.b16 %v1933, %v1933
      %v2062 = vpack.c.b16 %v1934, %v1934
      %v2063 = vpack.c.b16 %v1935, %v1935
      %vm2192 = vcmask 257024
      %2193 = vst.msk [vmem:[%s199] sm:$0xf] %vm2192, %v1936
      %2194 = vst.msk [vmem:[%s199 + $0x4] sm:$0xf] %vm2192, %v1937
      %2195 = vst.msk [vmem:[%s199 + $0x8] sm:$0xf] %vm2192, %v1938
      %2196 = vst.msk [vmem:[%s199 + $0xc] sm:$0xf] %vm2192, %v1939
      %2197 = vst.msk [vmem:[%s199 + $0x10] sm:$0xf] %vm2192, %v1940
      %2198 = vst.msk [vmem:[%s199 + $0x14] sm:$0xf] %vm2192, %v1941
      %2199 = vst.msk [vmem:[%s199 + $0x18] sm:$0xf] %vm2192, %v1942
      %2200 = vst.msk [vmem:[%s199 + $0x1c] sm:$0xf] %vm2192, %v1943
      %2201 = vst.msk [vmem:[%s199 + $0x20] sm:$0xf] %vm2192, %v1944
      %2202 = vst.msk [vmem:[%s199 + $0x24] sm:$0xf] %vm2192, %v1945
      %2203 = vst.msk [vmem:[%s199 + $0x28] sm:$0xf] %vm2192, %v1946
      %2204 = vst.msk [vmem:[%s199 + $0x2c] sm:$0xf] %vm2192, %v1947
      %2205 = vst.msk [vmem:[%s199 + $0x30] sm:$0xf] %vm2192, %v1948
      %2206 = vst.msk [vmem:[%s199 + $0x34] sm:$0xf] %vm2192, %v1949
      %2207 = vst.msk [vmem:[%s199 + $0x38] sm:$0xf] %vm2192, %v1950
      %2208 = vst.msk [vmem:[%s199 + $0x3c] sm:$0xf] %vm2192, %v1951
      %2209 = vst.msk [vmem:[%s199 + $0x40] sm:$0xf] %vm2192, %v1952
      %2210 = vst.msk [vmem:[%s199 + $0x44] sm:$0xf] %vm2192, %v1953
      %2211 = vst.msk [vmem:[%s199 + $0x48] sm:$0xf] %vm2192, %v1954
      %2212 = vst.msk [vmem:[%s199 + $0x4c] sm:$0xf] %vm2192, %v1955
      %2213 = vst.msk [vmem:[%s199 + $0x50] sm:$0xf] %vm2192, %v1956
      %2214 = vst.msk [vmem:[%s199 + $0x54] sm:$0xf] %vm2192, %v1957
      %2215 = vst.msk [vmem:[%s199 + $0x58] sm:$0xf] %vm2192, %v1958
      %2216 = vst.msk [vmem:[%s199 + $0x5c] sm:$0xf] %vm2192, %v1959
      %2217 = vst.msk [vmem:[%s199 + $0x60] sm:$0xf] %vm2192, %v1960
      %2218 = vst.msk [vmem:[%s199 + $0x64] sm:$0xf] %vm2192, %v1961
      %2219 = vst.msk [vmem:[%s199 + $0x68] sm:$0xf] %vm2192, %v1962
      %2220 = vst.msk [vmem:[%s199 + $0x6c] sm:$0xf] %vm2192, %v1963
      %2221 = vst.msk [vmem:[%s199 + $0x70] sm:$0xf] %vm2192, %v1964
      %2222 = vst.msk [vmem:[%s199 + $0x74] sm:$0xf] %vm2192, %v1965
      %2223 = vst.msk [vmem:[%s199 + $0x78] sm:$0xf] %vm2192, %v1966
      %2224 = vst.msk [vmem:[%s199 + $0x7c] sm:$0xf] %vm2192, %v1967
      %2225 = vst.msk [vmem:[%s199 + $0x80] sm:$0xf] %vm2192, %v1968
      %2226 = vst.msk [vmem:[%s199 + $0x84] sm:$0xf] %vm2192, %v1969
      %2227 = vst.msk [vmem:[%s199 + $0x88] sm:$0xf] %vm2192, %v1970
      %2228 = vst.msk [vmem:[%s199 + $0x8c] sm:$0xf] %vm2192, %v1971
      %2229 = vst.msk [vmem:[%s199 + $0x90] sm:$0xf] %vm2192, %v1972
      %2230 = vst.msk [vmem:[%s199 + $0x94] sm:$0xf] %vm2192, %v1973
      %2231 = vst.msk [vmem:[%s199 + $0x98] sm:$0xf] %vm2192, %v1974
      %2232 = vst.msk [vmem:[%s199 + $0x9c] sm:$0xf] %vm2192, %v1975
      %2233 = vst.msk [vmem:[%s199 + $0xa0] sm:$0xf] %vm2192, %v1976
      %2234 = vst.msk [vmem:[%s199 + $0xa4] sm:$0xf] %vm2192, %v1977
      %2235 = vst.msk [vmem:[%s199 + $0xa8] sm:$0xf] %vm2192, %v1978
      %2236 = vst.msk [vmem:[%s199 + $0xac] sm:$0xf] %vm2192, %v1979
      %2237 = vst.msk [vmem:[%s199 + $0xb0] sm:$0xf] %vm2192, %v1980
      %2238 = vst.msk [vmem:[%s199 + $0xb4] sm:$0xf] %vm2192, %v1981
      %2239 = vst.msk [vmem:[%s199 + $0xb8] sm:$0xf] %vm2192, %v1982
      %2240 = vst.msk [vmem:[%s199 + $0xbc] sm:$0xf] %vm2192, %v1983
      %2241 = vst.msk [vmem:[%s199 + $0xc0] sm:$0xf] %vm2192, %v1984
      %2242 = vst.msk [vmem:[%s199 + $0xc4] sm:$0xf] %vm2192, %v1985
      %2243 = vst.msk [vmem:[%s199 + $0xc8] sm:$0xf] %vm2192, %v1986
      %2244 = vst.msk [vmem:[%s199 + $0xcc] sm:$0xf] %vm2192, %v1987
      %2245 = vst.msk [vmem:[%s199 + $0xd0] sm:$0xf] %vm2192, %v1988
      %2246 = vst.msk [vmem:[%s199 + $0xd4] sm:$0xf] %vm2192, %v1989
      %2247 = vst.msk [vmem:[%s199 + $0xd8] sm:$0xf] %vm2192, %v1990
      %2248 = vst.msk [vmem:[%s199 + $0xdc] sm:$0xf] %vm2192, %v1991
      %2249 = vst.msk [vmem:[%s199 + $0xe0] sm:$0xf] %vm2192, %v1992
      %2250 = vst.msk [vmem:[%s199 + $0xe4] sm:$0xf] %vm2192, %v1993
      %2251 = vst.msk [vmem:[%s199 + $0xe8] sm:$0xf] %vm2192, %v1994
      %2252 = vst.msk [vmem:[%s199 + $0xec] sm:$0xf] %vm2192, %v1995
      %2253 = vst.msk [vmem:[%s199 + $0xf0] sm:$0xf] %vm2192, %v1996
      %2254 = vst.msk [vmem:[%s199 + $0xf4] sm:$0xf] %vm2192, %v1997
      %2255 = vst.msk [vmem:[%s199 + $0xf8] sm:$0xf] %vm2192, %v1998
      %2256 = vst.msk [vmem:[%s199 + $0xfc] sm:$0xf] %vm2192, %v1999
      %2257 = vst.msk [vmem:[%s199 + $0x100] sm:$0xf] %vm2192, %v2000
      %2258 = vst.msk [vmem:[%s199 + $0x104] sm:$0xf] %vm2192, %v2001
      %2259 = vst.msk [vmem:[%s199 + $0x108] sm:$0xf] %vm2192, %v2002
      %2260 = vst.msk [vmem:[%s199 + $0x10c] sm:$0xf] %vm2192, %v2003
      %2261 = vst.msk [vmem:[%s199 + $0x110] sm:$0xf] %vm2192, %v2004
      %2262 = vst.msk [vmem:[%s199 + $0x114] sm:$0xf] %vm2192, %v2005
      %2263 = vst.msk [vmem:[%s199 + $0x118] sm:$0xf] %vm2192, %v2006
      %2264 = vst.msk [vmem:[%s199 + $0x11c] sm:$0xf] %vm2192, %v2007
      %2265 = vst.msk [vmem:[%s199 + $0x120] sm:$0xf] %vm2192, %v2008
      %2266 = vst.msk [vmem:[%s199 + $0x124] sm:$0xf] %vm2192, %v2009
      %2267 = vst.msk [vmem:[%s199 + $0x128] sm:$0xf] %vm2192, %v2010
      %2268 = vst.msk [vmem:[%s199 + $0x12c] sm:$0xf] %vm2192, %v2011
      %2269 = vst.msk [vmem:[%s199 + $0x130] sm:$0xf] %vm2192, %v2012
      %2270 = vst.msk [vmem:[%s199 + $0x134] sm:$0xf] %vm2192, %v2013
      %2271 = vst.msk [vmem:[%s199 + $0x138] sm:$0xf] %vm2192, %v2014
      %2272 = vst.msk [vmem:[%s199 + $0x13c] sm:$0xf] %vm2192, %v2015
      %2273 = vst.msk [vmem:[%s199 + $0x140] sm:$0xf] %vm2192, %v2016
      %2274 = vst.msk [vmem:[%s199 + $0x144] sm:$0xf] %vm2192, %v2017
      %2275 = vst.msk [vmem:[%s199 + $0x148] sm:$0xf] %vm2192, %v2018
      %2276 = vst.msk [vmem:[%s199 + $0x14c] sm:$0xf] %vm2192, %v2019
      %2277 = vst.msk [vmem:[%s199 + $0x150] sm:$0xf] %vm2192, %v2020
      %2278 = vst.msk [vmem:[%s199 + $0x154] sm:$0xf] %vm2192, %v2021
      %2279 = vst.msk [vmem:[%s199 + $0x158] sm:$0xf] %vm2192, %v2022
      %2280 = vst.msk [vmem:[%s199 + $0x15c] sm:$0xf] %vm2192, %v2023
      %2281 = vst.msk [vmem:[%s199 + $0x160] sm:$0xf] %vm2192, %v2024
      %2282 = vst.msk [vmem:[%s199 + $0x164] sm:$0xf] %vm2192, %v2025
      %2283 = vst.msk [vmem:[%s199 + $0x168] sm:$0xf] %vm2192, %v2026
      %2284 = vst.msk [vmem:[%s199 + $0x16c] sm:$0xf] %vm2192, %v2027
      %2285 = vst.msk [vmem:[%s199 + $0x170] sm:$0xf] %vm2192, %v2028
      %2286 = vst.msk [vmem:[%s199 + $0x174] sm:$0xf] %vm2192, %v2029
      %2287 = vst.msk [vmem:[%s199 + $0x178] sm:$0xf] %vm2192, %v2030
      %2288 = vst.msk [vmem:[%s199 + $0x17c] sm:$0xf] %vm2192, %v2031
      %2289 = vst.msk [vmem:[%s199 + $0x180] sm:$0xf] %vm2192, %v2032
      %2290 = vst.msk [vmem:[%s199 + $0x184] sm:$0xf] %vm2192, %v2033
      %2291 = vst.msk [vmem:[%s199 + $0x188] sm:$0xf] %vm2192, %v2034
      %2292 = vst.msk [vmem:[%s199 + $0x18c] sm:$0xf] %vm2192, %v2035
      %2293 = vst.msk [vmem:[%s199 + $0x190] sm:$0xf] %vm2192, %v2036
      %2294 = vst.msk [vmem:[%s199 + $0x194] sm:$0xf] %vm2192, %v2037
      %2295 = vst.msk [vmem:[%s199 + $0x198] sm:$0xf] %vm2192, %v2038
      %2296 = vst.msk [vmem:[%s199 + $0x19c] sm:$0xf] %vm2192, %v2039
      %2297 = vst.msk [vmem:[%s199 + $0x1a0] sm:$0xf] %vm2192, %v2040
      %2298 = vst.msk [vmem:[%s199 + $0x1a4] sm:$0xf] %vm2192, %v2041
      %2299 = vst.msk [vmem:[%s199 + $0x1a8] sm:$0xf] %vm2192, %v2042
      %2300 = vst.msk [vmem:[%s199 + $0x1ac] sm:$0xf] %vm2192, %v2043
      %2301 = vst.msk [vmem:[%s199 + $0x1b0] sm:$0xf] %vm2192, %v2044
      %2302 = vst.msk [vmem:[%s199 + $0x1b4] sm:$0xf] %vm2192, %v2045
      %2303 = vst.msk [vmem:[%s199 + $0x1b8] sm:$0xf] %vm2192, %v2046
      %2304 = vst.msk [vmem:[%s199 + $0x1bc] sm:$0xf] %vm2192, %v2047
      %2305 = vst.msk [vmem:[%s199 + $0x1c0] sm:$0xf] %vm2192, %v2048
      %2306 = vst.msk [vmem:[%s199 + $0x1c4] sm:$0xf] %vm2192, %v2049
      %2307 = vst.msk [vmem:[%s199 + $0x1c8] sm:$0xf] %vm2192, %v2050
      %2308 = vst.msk [vmem:[%s199 + $0x1cc] sm:$0xf] %vm2192, %v2051
      %2309 = vst.msk [vmem:[%s199 + $0x1d0] sm:$0xf] %vm2192, %v2052
      %2310 = vst.msk [vmem:[%s199 + $0x1d4] sm:$0xf] %vm2192, %v2053
      %2311 = vst.msk [vmem:[%s199 + $0x1d8] sm:$0xf] %vm2192, %v2054
      %2312 = vst.msk [vmem:[%s199 + $0x1dc] sm:$0xf] %vm2192, %v2055
      %2313 = vst.msk [vmem:[%s199 + $0x1e0] sm:$0xf] %vm2192, %v2056
      %2314 = vst.msk [vmem:[%s199 + $0x1e4] sm:$0xf] %vm2192, %v2057
      %2315 = vst.msk [vmem:[%s199 + $0x1e8] sm:$0xf] %vm2192, %v2058
      %2316 = vst.msk [vmem:[%s199 + $0x1ec] sm:$0xf] %vm2192, %v2059
      %2317 = vst.msk [vmem:[%s199 + $0x1f0] sm:$0xf] %vm2192, %v2060
      %2318 = vst.msk [vmem:[%s199 + $0x1f4] sm:$0xf] %vm2192, %v2061
      %2319 = vst.msk [vmem:[%s199 + $0x1f8] sm:$0xf] %vm2192, %v2062
      %2320 = vst.msk [vmem:[%s199 + $0x1fc] sm:$0xf] %vm2192, %v2063
      %s2321 = smul.u32 128, %s15
      %p2322 = scmp.lt.s32.totalorder %s2321, 2047
      %s2323 = scalar_select %p2322, %s2321, 2047
      %s2324 = smul.addr %s2323, 4
      %s2325 = scalar_lea.vmem %s4, %s2324
      // Predicated region
      $region37: #{pallas_matmul_affine.1} parent=35 // pred_check
        %p2326 = pneg %p122
      $region38: #{pallas_matmul_affine.1} parent=35 // pred_check_branch
        %2328 = sbr.rel (%p2326) target = $region40
      $region39: #{pallas_matmul_affine.1} parent=35 // pred_region
        %s2329 = smul.u32 128, %s15
      $region40: #{pallas_matmul_affine.1} parent=35 // pred_fallthru
        _
    $region36: #{pallas_matmul_affine.1} parent=5 // pred_fallthru
      _
    %p2330 = scmp.le.s32.totalorder 2, %s10
    // Predicated region
    $region41: #{pallas_matmul_affine.1} parent=5 // pred_check
      %p2331 = pneg %p2330
    $region42: #{pallas_matmul_affine.1} parent=5 // pred_check_branch
      %2333 = sbr.rel (%p2331) target = $region44
    $region43: #{pallas_matmul_affine.1} parent=5 // pred_region
      %s2334 = ssub.s32 %s10, 2
      // Predicated region
      $region45: #{pallas_matmul_affine.1} parent=43 // pred_check
        %p2335 = pneg %p128
      $region46: #{pallas_matmul_affine.1} parent=43 // pred_check_branch
        %2337 = sbr.rel (%p2335) target = $region48
      $region47: #{pallas_matmul_affine.1} parent=43 // pred_region
        %s2338 = smul.u32 128, %s16
        %p2339 = scmp.lt.s32.totalorder %s2338, 2047
        %s2340 = scalar_select %p2339, %s2338, 2047
        %s2341 = smul.addr %s2340, 4
        %s2342 = scalar_lea.vmem %s4, %s2341
      $region48: #{pallas_matmul_affine.1} parent=43 // pred_fallthru
        _
    $region44: #{pallas_matmul_affine.1} parent=5 // pred_fallthru
      _
  $region6: #{pallas_matmul_affine.1} parent=0 // loop_footer
    %s14 = sadd.s32 1, %s10
  $region7: #{pallas_matmul_affine.1} parent=0 // loop_footer_branch
    %9 = sbr.rel target = $region3
  $region8: #{pallas_matmul_affine.1} parent=0 // loop_exit
    _

</llo_original>
